<compile_context>
chip_gen: v6e
topology: v6e:2x2x1
jax: 0.10.0
libtpu: 0.0.40
codegen_flags: <defaults>
</compile_context>

<pallas_src>
import functools

import jax
import jax.numpy as jnp
from jax import lax
from jax.experimental import pallas as pl
from jax.experimental.pallas import tpu as pltpu


def _pair(v):
    return tuple(v) if isinstance(v, (tuple, list)) else (v, v)


def _round_up(v, m):
    return ((v + m - 1) // m) * m


def _make_kernel(TILE_I, Wosub, Cin, Nf, offsets):
    """offsets: static tuple of (row_off, col_off) into the padded raw input,
    one per contraction slice of the fused weight (row-major over OFF_H x OFF_W)."""
    M = TILE_I * Wosub

    def kernel(x_ref, w_ref, b_ref, o_ref):
        # x_ref: (Hp, Wp, Cin)        padded raw input, one batch element
        # w_ref: (n_off, Cin, Nf)     fused per-offset weights, Nf = sH*sW*Cout
        # b_ref: (1, Nf)              f32 bias tiled over the phases
        # o_ref: (TILE_I, Wosub, Nf)  phase-factored output row tile
        i0 = pl.multiple_of(pl.program_id(1) * TILE_I, TILE_I)

        acc = None
        for t, (rh, rw) in enumerate(offsets):        # static, fully unrolled
            blk = x_ref[pl.ds(i0 + rh, TILE_I), rw:rw + Wosub, :]   # (TILE_I,Wosub,Cin)
            d = jnp.dot(blk.reshape(M, Cin), w_ref[t],
                        preferred_element_type=jnp.float32)
            acc = d if acc is None else acc + d

        out = acc + b_ref[...]                         # bias added once per tile
        o_ref[...] = out.reshape(TILE_I, Wosub, Nf).astype(o_ref.dtype)

    return kernel


@functools.partial(
    jax.jit,
    static_argnames=("stride", "padding", "output_padding", "dilation",
                     "groups", "tile_rows"))
def meta_conv_transpose2d(x, weight, bias=None, *, stride=(1, 1), padding=(0, 0),
                          output_padding=(0, 0), dilation=(1, 1), groups=1,
                          tile_rows=None):
    """Equivalent of F.conv_transpose2d for groups == 1 (NCHW in / NCHW out)."""
    assert groups == 1  # TODO(synk): grouped transpose-conv not implemented
    N, Cin, H, W = x.shape
    Cin_w, Cout, kH, kW = weight.shape
    assert Cin_w == Cin
    sH, sW = _pair(stride)
    pH, pW = _pair(padding)
    opH, opW = _pair(output_padding)
    dH, dW = _pair(dilation)

    Ho = (H - 1) * sH - 2 * pH + dH * (kH - 1) + opH + 1
    Wo = (W - 1) * sW - 2 * pW + dW * (kW - 1) + opW + 1
    assert Ho > 0 and Wo > 0

    out_dtype = x.dtype
    if bias is None:
        bias = jnp.zeros((Cout,), out_dtype)

    # ---- static stride-phase decomposition --------------------------------
    # Output row oh = i*sH + ph receives kernel tap kh iff
    # (ph + pH - kh*dH) % sH == 0, from raw input row i + offh with
    # offh = (ph + pH - kh*dH) // sH.  Same for columns.
    taps_h = [[(kh, (ph + pH - kh * dH) // sH) for kh in range(kH)
               if (ph + pH - kh * dH) % sH == 0] for ph in range(sH)]
    taps_w = [[(kw, (pw + pW - kw * dW) // sW) for kw in range(kW)
               if (pw + pW - kw * dW) % sW == 0] for pw in range(sW)]
    off_h = sorted({o for taps in taps_h for (_, o) in taps})
    off_w = sorted({o for taps in taps_w for (_, o) in taps})
    assert off_h and off_w          # every kernel tap belongs to some phase
    n_off = len(off_h) * len(off_w)

    Hosub = -(-Ho // sH)                       # output rows per H-phase
    Wosub = _round_up(-(-Wo // sW), 8)         # output cols per W-phase (8-aligned)
    Nf = sH * sW * Cout                        # fused (ph, pw, Cout) channels

    # Row tile: target a matmul M = TILE_I * Wosub of ~2048 rows to amortize
    # per-grid-step overhead and the unrolled per-offset gather.
    if tile_rows is None:
        tile_rows = max(1, 2048 // max(Wosub, 1))
    TILE_I = max(1, min(int(tile_rows), Hosub))
    n_tiles = -(-Hosub // TILE_I)
    Hosub_t = TILE_I * n_tiles

    # Zero-pad the raw (never dilated) input so every offset read is in bounds.
    pad_t = max(0, -off_h[0]); pad_b = max(0, Hosub_t + off_h[-1] - H)
    pad_l = max(0, -off_w[0]); pad_r = max(0, Wosub + off_w[-1] - W)
    x_p = jnp.pad(jnp.transpose(x, (0, 2, 3, 1)),
                  ((0, 0), (pad_t, pad_b), (pad_l, pad_r), (0, 0)))
    Hp, Wp = H + pad_t + pad_b, W + pad_l + pad_r
    # TODO(synk): halo-tile the input rows (instead of whole-image blocks) for
    # images too large to keep VMEM-resident per batch element.

    # Fused weight (n_off, Cin, Nf): slice t = (rh, rw) carries W[:, :, kh, kw]
    # in the (ph, pw) column block iff that output phase uses input offset
    # (off_h[rh], off_w[rw]); unused pairs stay zero, so bias-only phases need
    # no special handling and the input image is read only once.
    wf = jnp.zeros((len(off_h), len(off_w), Cin, sH, sW, Cout), weight.dtype)
    for ph, th in enumerate(taps_h):
        for (kh, oh_) in th:
            rh = off_h.index(oh_)
            for pw, tw in enumerate(taps_w):
                for (kw, ow_) in tw:
                    rw = off_w.index(ow_)
                    wf = wf.at[rh, rw, :, ph, pw, :].set(weight[:, :, kh, kw])
    wf = wf.reshape(n_off, Cin, Nf).astype(out_dtype)
    b_f = jnp.tile(bias.astype(jnp.float32), sH * sW).reshape(1, Nf)

    # Row-major over (off_h, off_w) — must match wf's reshape order.
    offsets = tuple((rh_v + pad_t, rw_v + pad_l)
                    for rh_v in off_h for rw_v in off_w)

    # VMEM budget including Mosaic lane(->128) / sublane(->8) padding, capped
    # against the physical VMEM of the current chip generation.
    lane, sub = 128, 8
    isz = jnp.dtype(out_dtype).itemsize
    in_bytes = Hp * _round_up(Wp, sub) * _round_up(Cin, lane) * isz
    w_bytes = n_off * _round_up(Cin, sub) * _round_up(Nf, lane) * isz
    out_bytes = TILE_I * _round_up(Wosub, sub) * _round_up(Nf, lane) * isz
    acc_bytes = TILE_I * Wosub * _round_up(Nf, lane) * 4
    est = 2 * (in_bytes + w_bytes + out_bytes + sub * lane * 4) + acc_bytes
    try:
        phys_vmem = int(pltpu.get_tpu_info().vmem_capacity_bytes)
    except Exception:
        phys_vmem = 64 * 2 ** 20            # v7x-conservative fallback
    vmem_limit = int(min(max(2 * est, 32 * 2 ** 20), int(0.75 * phys_vmem)))

    kernel = _make_kernel(TILE_I, Wosub, Cin, Nf, offsets)
    out = pl.pallas_call(
        kernel,
        out_shape=jax.ShapeDtypeStruct((N, Hosub_t, Wosub, Nf), out_dtype),
        grid_spec=pltpu.PrefetchScalarGridSpec(
            num_scalar_prefetch=0,
            grid=(N, n_tiles),
            in_specs=[
                # Whole padded image per batch element; block index is constant
                # along the row-tile axis -> DMA'd from HBM once per n.
                pl.BlockSpec((None, Hp, Wp, Cin), lambda n, t: (n, 0, 0, 0)),
                pl.BlockSpec((n_off, Cin, Nf), lambda n, t: (0, 0, 0)),
                pl.BlockSpec((1, Nf), lambda n, t: (0, 0)),
            ],
            out_specs=pl.BlockSpec((None, TILE_I, Wosub, Nf),
                                   lambda n, t: (n, t, 0, 0)),
        ),
        compiler_params=pltpu.CompilerParams(
            dimension_semantics=("parallel", "parallel"),
            vmem_limit_bytes=vmem_limit,
        ),
    )(x_p, wf, b_f)

    # Interleave phases by reshape (oh = i*sH + ph, ow = j*sW + pw are exactly
    # the contiguous orders) and return to NCHW; this is the only XLA copy.
    y = out.reshape(N, Hosub_t, Wosub, sH, sW, Cout)
    y = jnp.transpose(y, (0, 5, 1, 3, 2, 4))          # (N, Cout, i, ph, j, pw)
    y = y.reshape(N, Cout, Hosub_t * sH, Wosub * sW)[:, :, :Ho, :Wo]
    return y


def _reference(x, weight, bias, stride, padding, output_padding, dilation):
    """Independent XLA reference: regular conv with lhs_dilation on flipped kernel."""
    sH, sW = _pair(stride)
    pH, pW = _pair(padding)
    opH, opW = _pair(output_padding)
    dH, dW = _pair(dilation)
    kH, kW = weight.shape[2], weight.shape[3]
    padLh = dH * (kH - 1) - pH
    padLw = dW * (kW - 1) - pW
    w_oihw = jnp.transpose(jnp.flip(weight, axis=(2, 3)), (1, 0, 2, 3))
    y = lax.conv_general_dilated(
        x, w_oihw,
        window_strides=(1, 1),
        padding=[(padLh, padLh + opH), (padLw, padLw + opW)],
        lhs_dilation=(sH, sW),
        rhs_dilation=(dH, dW),
        dimension_numbers=("NCHW", "OIHW", "NCHW"))
    return y + bias.reshape(1, -1, 1, 1)


if __name__ == "__main__":
    key = jax.random.PRNGKey(0)

    def run_case(N, Cin, Cout, H, W, k, stride, padding, output_padding,
                 dilation, tile_rows=None):
        kx, kw_, kb = jax.random.split(key, 3)
        x = jax.random.normal(kx, (N, Cin, H, W), dtype=jnp.float32)
        # ConvTranspose2d weight shape: (in_channels, out_channels/groups, kH, kW)
        weight = 0.1 * jax.random.normal(kw_, (Cin, Cout, k, k), dtype=jnp.float32)
        bias = 0.1 * jax.random.normal(kb, (Cout,), dtype=jnp.float32)

        y = meta_conv_transpose2d(
            x, weight, bias, stride=stride, padding=padding,
            output_padding=output_padding, dilation=dilation, groups=1,
            tile_rows=tile_rows)
        y = jax.block_until_ready(y)

        y_ref = _reference(x, weight, bias, stride, padding, output_padding,
                           dilation)
        assert y.shape == y_ref.shape, (y.shape, y_ref.shape)
        err = float(jnp.max(jnp.abs(y - y_ref)))
        assert jnp.allclose(y, y_ref, atol=1e-4, rtol=1e-4), err

    # Module config: MetaConvTranspose2d(4, 8, kernel_size=3, stride=2, padding=1)
    run_case(2, 4, 8, 16, 16, 3, (2, 2), (1, 1), (0, 0), (1, 1))
    # Asymmetric stride/padding/dilation + output_padding; exercises zero-weight
    # (bias-only) phases and the multi-row-tile grid path.
    run_case(2, 4, 8, 16, 16, 3, (2, 1), (2, 1), (1, 0), (2, 1), tile_rows=4)

    print("KERNEL_OK")
</pallas_src>

<mosaic_0001>
module attributes {stable_mosaic.version = 11 : i64} {
  func.func @kernel(%arg0: i32, %arg1: i32, %arg2: memref<1x17x17x4xf32, #tpu.memory_space<vmem>>, %arg3: memref<4x4x32xf32, #tpu.memory_space<vmem>>, %arg4: memref<1x32xf32, #tpu.memory_space<vmem>>, %arg5: memref<1x16x16x32xf32, #tpu.memory_space<vmem>>) attributes {dimension_semantics = [#tpu.dimension_semantics<parallel>, #tpu.dimension_semantics<parallel>], iteration_bounds = array<i64: 2, 1>, scalar_prefetch = 0 : i64, scratch_operands = 0 : i64, tpu.core_type = #tpu.core_type<tc>, window_params = [{transform_indices = @transform_0, window_bounds = array<i64: 1, 17, 17, 4>}, {pipeline_mode = #tpu.pipeline_mode<synchronous>, transform_indices = @transform_1, window_bounds = array<i64: 4, 4, 32>}, {pipeline_mode = #tpu.pipeline_mode<synchronous>, transform_indices = @transform_2, window_bounds = array<i64: 1, 32>}, {transform_indices = @transform_3, window_bounds = array<i64: 1, 16, 16, 32>}]} {
    %c16_i32 = arith.constant 16 : i32
    %0 = arith.muli %arg1, %c16_i32 : i32
    %1 = tpu.assume_multiple %0, 16 : i32
    %c0_i32 = arith.constant 0 : i32
    %2 = arith.addi %1, %c0_i32 : i32
    %c0 = arith.constant 0 : index
    %3 = arith.index_cast %2 : i32 to index
    %c0_0 = arith.constant 0 : index
    %c0_1 = arith.constant 0 : index
    %4 = vector.load %arg2[%c0, %3, %c0_0, %c0_1] : memref<1x17x17x4xf32, #tpu.memory_space<vmem>>, vector<1x16x16x4xf32>
    %5 = vector.shape_cast %4 : vector<1x16x16x4xf32> to vector<16x16x4xf32>
    %6 = vector.shape_cast %5 : vector<16x16x4xf32> to vector<256x4xf32>
    %c0_2 = arith.constant 0 : index
    %c0_3 = arith.constant 0 : index
    %c0_4 = arith.constant 0 : index
    %7 = vector.load %arg3[%c0_2, %c0_3, %c0_4] : memref<4x4x32xf32, #tpu.memory_space<vmem>>, vector<1x4x32xf32>
    %8 = vector.shape_cast %7 : vector<1x4x32xf32> to vector<4x32xf32>
    %cst = arith.constant dense<0.000000e+00> : vector<256x32xf32>
    %9 = tpu.matmul %6, %8, %cst {dimension_numbers = #tpu.dot_dimension_numbers<[1], [0], [0], [1], [0, 0, 1, 1], [], []>} : vector<256x4xf32>, vector<4x32xf32>, vector<256x32xf32> -> vector<256x32xf32>
    %c0_i32_5 = arith.constant 0 : i32
    %10 = arith.addi %1, %c0_i32_5 : i32
    %c0_6 = arith.constant 0 : index
    %11 = arith.index_cast %10 : i32 to index
    %c1 = arith.constant 1 : index
    %c0_7 = arith.constant 0 : index
    %12 = vector.load %arg2[%c0_6, %11, %c1, %c0_7] : memref<1x17x17x4xf32, #tpu.memory_space<vmem>>, vector<1x16x16x4xf32>
    %13 = vector.shape_cast %12 : vector<1x16x16x4xf32> to vector<16x16x4xf32>
    %14 = vector.shape_cast %13 : vector<16x16x4xf32> to vector<256x4xf32>
    %c1_8 = arith.constant 1 : index
    %c0_9 = arith.constant 0 : index
    %c0_10 = arith.constant 0 : index
    %15 = vector.load %arg3[%c1_8, %c0_9, %c0_10] : memref<4x4x32xf32, #tpu.memory_space<vmem>>, vector<1x4x32xf32>
    %16 = vector.shape_cast %15 : vector<1x4x32xf32> to vector<4x32xf32>
    %cst_11 = arith.constant dense<0.000000e+00> : vector<256x32xf32>
    %17 = tpu.matmul %14, %16, %cst_11 {dimension_numbers = #tpu.dot_dimension_numbers<[1], [0], [0], [1], [0, 0, 1, 1], [], []>} : vector<256x4xf32>, vector<4x32xf32>, vector<256x32xf32> -> vector<256x32xf32>
    %18 = arith.addf %9, %17 : vector<256x32xf32>
    %c1_i32 = arith.constant 1 : i32
    %19 = arith.addi %1, %c1_i32 : i32
    %c0_12 = arith.constant 0 : index
    %20 = arith.index_cast %19 : i32 to index
    %c0_13 = arith.constant 0 : index
    %c0_14 = arith.constant 0 : index
    %21 = vector.load %arg2[%c0_12, %20, %c0_13, %c0_14] : memref<1x17x17x4xf32, #tpu.memory_space<vmem>>, vector<1x16x16x4xf32>
    %22 = vector.shape_cast %21 : vector<1x16x16x4xf32> to vector<16x16x4xf32>
    %23 = vector.shape_cast %22 : vector<16x16x4xf32> to vector<256x4xf32>
    %c2 = arith.constant 2 : index
    %c0_15 = arith.constant 0 : index
    %c0_16 = arith.constant 0 : index
    %24 = vector.load %arg3[%c2, %c0_15, %c0_16] : memref<4x4x32xf32, #tpu.memory_space<vmem>>, vector<1x4x32xf32>
    %25 = vector.shape_cast %24 : vector<1x4x32xf32> to vector<4x32xf32>
    %cst_17 = arith.constant dense<0.000000e+00> : vector<256x32xf32>
    %26 = tpu.matmul %23, %25, %cst_17 {dimension_numbers = #tpu.dot_dimension_numbers<[1], [0], [0], [1], [0, 0, 1, 1], [], []>} : vector<256x4xf32>, vector<4x32xf32>, vector<256x32xf32> -> vector<256x32xf32>
    %27 = arith.addf %18, %26 : vector<256x32xf32>
    %c1_i32_18 = arith.constant 1 : i32
    %28 = arith.addi %1, %c1_i32_18 : i32
    %c0_19 = arith.constant 0 : index
    %29 = arith.index_cast %28 : i32 to index
    %c1_20 = arith.constant 1 : index
    %c0_21 = arith.constant 0 : index
    %30 = vector.load %arg2[%c0_19, %29, %c1_20, %c0_21] : memref<1x17x17x4xf32, #tpu.memory_space<vmem>>, vector<1x16x16x4xf32>
    %31 = vector.shape_cast %30 : vector<1x16x16x4xf32> to vector<16x16x4xf32>
    %32 = vector.shape_cast %31 : vector<16x16x4xf32> to vector<256x4xf32>
    %c3 = arith.constant 3 : index
    %c0_22 = arith.constant 0 : index
    %c0_23 = arith.constant 0 : index
    %33 = vector.load %arg3[%c3, %c0_22, %c0_23] : memref<4x4x32xf32, #tpu.memory_space<vmem>>, vector<1x4x32xf32>
    %34 = vector.shape_cast %33 : vector<1x4x32xf32> to vector<4x32xf32>
    %cst_24 = arith.constant dense<0.000000e+00> : vector<256x32xf32>
    %35 = tpu.matmul %32, %34, %cst_24 {dimension_numbers = #tpu.dot_dimension_numbers<[1], [0], [0], [1], [0, 0, 1, 1], [], []>} : vector<256x4xf32>, vector<4x32xf32>, vector<256x32xf32> -> vector<256x32xf32>
    %36 = arith.addf %27, %35 : vector<256x32xf32>
    %c0_25 = arith.constant 0 : index
    %c0_26 = arith.constant 0 : index
    %37 = vector.load %arg4[%c0_25, %c0_26] : memref<1x32xf32, #tpu.memory_space<vmem>>, vector<1x32xf32>
    %38 = vector.broadcast %37 : vector<1x32xf32> to vector<256x32xf32>
    %39 = arith.addf %36, %38 : vector<256x32xf32>
    %40 = vector.shape_cast %39 : vector<256x32xf32> to vector<16x16x32xf32>
    %c0_27 = arith.constant 0 : index
    %c0_28 = arith.constant 0 : index
    %c0_29 = arith.constant 0 : index
    %c0_30 = arith.constant 0 : index
    %41 = vector.load %arg5[%c0_27, %c0_28, %c0_29, %c0_30] : memref<1x16x16x32xf32, #tpu.memory_space<vmem>>, vector<1x16x16x32xf32>
    %42 = vector.shape_cast %41 : vector<1x16x16x32xf32> to vector<16x16x32xf32>
    %43 = vector.shape_cast %40 : vector<16x16x32xf32> to vector<1x16x16x32xf32>
    tpu.vector_store %arg5[%c0_27, %c0_28, %c0_29, %c0_30], %43 {strides = array<i32>} : memref<1x16x16x32xf32, #tpu.memory_space<vmem>>, vector<1x16x16x32xf32>,
    return
  }
  func.func @transform_0(%arg0: i32, %arg1: i32) -> (i32, i32, i32, i32) {
    %c0_i32 = arith.constant 0 : i32
    %c0_i32_0 = arith.constant 0 : i32
    %c0_i32_1 = arith.constant 0 : i32
    %c0_i32_2 = arith.constant 0 : i32
    return %arg0, %c0_i32, %c0_i32_0, %c0_i32_1 : i32, i32, i32, i32
  }
  func.func @transform_1(%arg0: i32, %arg1: i32) -> (i32, i32, i32) {
    %c0_i32 = arith.constant 0 : i32
    %c0_i32_0 = arith.constant 0 : i32
    %c0_i32_1 = arith.constant 0 : i32
    %c0_i32_2 = arith.constant 0 : i32
    return %c0_i32, %c0_i32_0, %c0_i32_1 : i32, i32, i32
  }
  func.func @transform_2(%arg0: i32, %arg1: i32) -> (i32, i32) {
    %c0_i32 = arith.constant 0 : i32
    %c0_i32_0 = arith.constant 0 : i32
    %c0_i32_1 = arith.constant 0 : i32
    return %c0_i32, %c0_i32_0 : i32, i32
  }
  func.func @transform_3(%arg0: i32, %arg1: i32) -> (i32, i32, i32, i32) {
    %c0_i32 = arith.constant 0 : i32
    %c0_i32_0 = arith.constant 0 : i32
    %c0_i32_1 = arith.constant 0 : i32
    return %arg0, %arg1, %c0_i32, %c0_i32_0 : i32, i32, i32, i32
  }
}

</mosaic_0001>

<llo_original>
// kernel: tile.8
$region0: #{tile.8}
  #allocation0 [shape = 's32[1]{0}', space=sflag, size = 0x4, scoped, tag = 'scoped memory for tile.8']
  %s0 = inlined_call_operand.vmem [shape: f32[8], index: 0, kind: input, shape index: {}]
  %s1 = inlined_call_operand.vmem [shape: f32[4,8], index: 1, kind: output, shape index: {}]
  // Predicated region
  $region2: #{tile.8} parent=0 // pred_check
    _
  $region3: #{tile.8} parent=0 // pred_check_branch
    %3 = sbr.rel (0) target = $region5
  $region4: #{tile.8} parent=0 // pred_region
    _
  $region5: #{tile.8} parent=0 // pred_fallthru
    _
  %v4 = vld [vmem:[%s0] ss:$0 sm:$0xff]
  %5 = vst [vmem:[%s1] sm:$0xf] %v4

// kernel: tile.9
$region0: #{tile.9}
  %s0 = inlined_call_operand.vmem [shape: f32[4,8], index: 0, kind: input, shape index: {}]
  %s1 = inlined_call_operand.vmem [shape: f32[1,32], index: 1, kind: output, shape index: {}]
  $region1: #{tile.9} parent=0
    #allocation0 [shape = 'u8[4096]{0}', space=vmem, size = 0x1000, scoped, tag = 'scoped mem for output reshape']
    #allocation1 [shape = 'u8[4096]{0}', space=vmem, size = 0x1000, scoped, tag = 'scoped mem for input reshape']
    %s3 = sshll.u32 1, 4
    %s4 = ssub.s32 %s3, 1
    %v5 = vld [vmem:[%s0] sm:%s4]
    %6 = vst [vmem:[#allocation1] sm:%s4] %v5
    %v7 = vld [vmem:[#allocation1] sm:$0x1]
    %vm8 = vcmask 64512
    %9 = vst.msk [vmem:[#allocation0] sm:$0x1] %vm8, %v7
    %s10 = scalar_lea.vmem [#allocation1], 3
    %v11 = vld [vmem:[%s10] sm:$0x1]
    %12 = vrot.lane.b32.xlu0 %v11, 24
    %v13 = vpop.permute.xlu0 %12
    %vm14 = vcmask 261312
    %15 = vst.msk [vmem:[#allocation0] sm:$0x1] %vm14, %v13
    %s16 = scalar_lea.vmem [#allocation1], 2
    %v17 = vld [vmem:[%s16] sm:$0x1]
    %18 = vrot.lane.b32.xlu0 %v17, 16
    %v19 = vpop.permute.xlu0 %18
    %vm20 = vcmask 195712
    %21 = vst.msk [vmem:[#allocation0] sm:$0x1] %vm20, %v19
    %s22 = scalar_lea.vmem [#allocation1], 1
    %v23 = vld [vmem:[%s22] sm:$0x1]
    %24 = vrot.lane.b32.xlu0 %v23, 8
    %v25 = vpop.permute.xlu0 %24
    %vm26 = vcmask 130112
    %27 = vst.msk [vmem:[#allocation0] sm:$0x1] %vm26, %v25
    %s29 = sshll.u32 1, 1
    %s30 = ssub.s32 %s29, 1
    %v32 = vld [vmem:[#allocation0] sm:%s30]
    %s33 = sshll.u32 1, 1
    %s34 = ssub.s32 %s33, 1
    %35 = vst [vmem:[%s1] sm:%s34] %v32

// kernel: meta_conv_transpose2d.1
$region0: #{meta_conv_transpose2d.1}
  #allocation0 [shape = 'u32[]', space=smem, size = 0x4, offset = 0x4, fixed_abs, tag = 'smem constant byte address 0x4 - core index']
  #allocation1 [shape = 'u32[144,128]{1,0:T(1,128)}', space=vmem, size = 0x12000, scoped, tag = 'internal scratch']
  %s0 = inlined_call_operand.vmem [shape: f32[2,17,17,4], index: 0, kind: input, shape index: {}]
  %s1 = inlined_call_operand.vmem [shape: f32[4,4,32], index: 1, kind: input, shape index: {}]
  %s2 = inlined_call_operand.vmem [shape: f32[1,32], index: 2, kind: input, shape index: {}]
  %s3 = inlined_call_operand.vmem [shape: f32[2,16,16,32], index: 3, kind: output, shape index: {}]
  %s4 = sld [smem:[#allocation0]]
  $region45: #{meta_conv_transpose2d.1} parent=0
    _
  %s6 = ssub.s32 1, %s4
  %s7 = scalar_select 0, %s6, %s4
  loop: start=0, step=1, limit=4
  $region2: #{meta_conv_transpose2d.1} parent=0 // loop_pre_header
    _
  $region3: #{meta_conv_transpose2d.1} parent=0 // loop_header
    %s9 = sphi 0, %s13
    %p10 = scmp.ge.s32.totalorder %s9, 4
    %s16 = sphi 0, %s28
    %s17 = sphi 0, %s24
    %s18 = sphi 0, %s16
    %s19 = sphi 0, %s17
    %s20 = sphi 0, %s18
    %s21 = sphi 0, %s19
    %s31 = sphi 0, %s33
    %s34 = sphi 0, %s31
    %s35 = sphi 0, %s34
    %s51 = sphi 0, %s35
    %s55 = sphi 0, %s55
    %s57 = sphi 0, %s55
    %s58 = sphi 0, %s57
    %s72 = sphi 0, %s58
    %s76 = sphi 0, %s76
    %s78 = sphi 0, %s76
    %s79 = sphi 0, %s78
    %s93 = sphi 0, %s79
    %s101 = sphi 0, %s103
    %s104 = sphi 0, %s101
    %s105 = sphi 0, %s104
    %s121 = sphi 0, %s105
  $region4: #{meta_conv_transpose2d.1} parent=0 // loop_header_branch
    %12 = sbr.rel (%p10) target = $region8
  $region5: #{meta_conv_transpose2d.1} parent=0 // loop_body
    %s14 = ssub.s32 %s9, 1
    %s15 = ssub.s32 %s9, 2
    %s22 = sadd.s32 1, %s17
    %p23 = scmp.ge.s32.totalorder %s22, 1
    %s24 = scalar_select %p23, 0, %s22
    %s25 = sadd.s32 1, %s16
    %s26 = scalar_select %p23, %s25, %s16
    %p27 = scmp.ge.s32.totalorder %s26, 2
    %s28 = scalar_select %p27, 0, %s26
    %s29 = ssub.s32 %s16, %s28
    %p30 = scmp.eq.s32.totalorder %s29, 0
    %s32 = sadd.s32 %s31, 1
    %s33 = scalar_select %p30, %s31, %s32
    %p36 = pneg %p30
    %p37 = scmp.eq.s32.totalorder %s9, 1
    %p38 = por %p36, %p37
    %p39 = scmp.ne.s32.totalorder %s31, %s34
    %p40 = scmp.eq.s32.totalorder %s9, 0
    %p41 = por %p39, %p40
    %p42 = scmp.ne.s32.totalorder %s31, %s34
    %p43 = scmp.eq.s32.totalorder %s14, 1
    %p44 = por %p42, %p43
    %p45 = scmp.ne.s32.totalorder %s34, %s35
    %p46 = scmp.eq.s32.totalorder %s14, 0
    %p47 = por %p45, %p46
    %p48 = scmp.ne.s32.totalorder %s34, %s35
    %p49 = scmp.eq.s32.totalorder %s15, 1
    %p50 = por %p48, %p49
    %p52 = scmp.ne.s32.totalorder %s35, %s51
    %p53 = scmp.eq.s32.totalorder %s15, 0
    %p54 = por %p52, %p53
    %s56 = sadd.s32 %s55, 1
    %p59 = scmp.eq.s32.totalorder %s9, 1
    %p60 = scmp.ne.s32.totalorder %s55, %s57
    %p61 = scmp.eq.s32.totalorder %s9, 0
    %p62 = por %p60, %p61
    %p63 = scmp.ne.s32.totalorder %s55, %s57
    %p64 = scmp.eq.s32.totalorder %s14, 1
    %p65 = por %p63, %p64
    %p66 = scmp.ne.s32.totalorder %s57, %s58
    %p67 = scmp.eq.s32.totalorder %s14, 0
    %p68 = por %p66, %p67
    %p69 = scmp.ne.s32.totalorder %s57, %s58
    %p70 = scmp.eq.s32.totalorder %s15, 1
    %p71 = por %p69, %p70
    %p73 = scmp.ne.s32.totalorder %s58, %s72
    %p74 = scmp.eq.s32.totalorder %s15, 0
    %p75 = por %p73, %p74
    %s77 = sadd.s32 %s76, 1
    %p80 = scmp.eq.s32.totalorder %s9, 1
    %p81 = scmp.ne.s32.totalorder %s76, %s78
    %p82 = scmp.eq.s32.totalorder %s9, 0
    %p83 = por %p81, %p82
    %p84 = scmp.ne.s32.totalorder %s76, %s78
    %p85 = scmp.eq.s32.totalorder %s14, 1
    %p86 = por %p84, %p85
    %p87 = scmp.ne.s32.totalorder %s78, %s79
    %p88 = scmp.eq.s32.totalorder %s14, 0
    %p89 = por %p87, %p88
    %p90 = scmp.ne.s32.totalorder %s78, %s79
    %p91 = scmp.eq.s32.totalorder %s15, 1
    %p92 = por %p90, %p91
    %p94 = scmp.ne.s32.totalorder %s79, %s93
    %p95 = scmp.eq.s32.totalorder %s15, 0
    %p96 = por %p94, %p95
    %s97 = ssub.s32 %s16, %s28
    %s98 = ssub.s32 %s17, %s24
    %s99 = sor.u32 %s97, %s98
    %p100 = scmp.eq.s32.totalorder %s99, 0
    %s102 = sadd.s32 %s101, 1
    %s103 = scalar_select %p100, %s101, %s102
    %p106 = pneg %p100
    %p107 = scmp.eq.s32.totalorder %s9, 1
    %p108 = por %p106, %p107
    %p109 = scmp.ne.s32.totalorder %s101, %s104
    %p110 = scmp.eq.s32.totalorder %s9, 0
    %p111 = por %p109, %p110
    %p112 = scmp.ne.s32.totalorder %s101, %s104
    %p113 = scmp.eq.s32.totalorder %s14, 1
    %p114 = por %p112, %p113
    %p115 = scmp.ne.s32.totalorder %s104, %s105
    %p116 = scmp.eq.s32.totalorder %s14, 0
    %p117 = por %p115, %p116
    %p118 = scmp.ne.s32.totalorder %s104, %s105
    %p119 = scmp.eq.s32.totalorder %s15, 1
    %p120 = por %p118, %p119
    %p122 = scmp.ne.s32.totalorder %s105, %s121
    %p123 = scmp.eq.s32.totalorder %s15, 0
    %p124 = por %p122, %p123
    %p125 = scmp.le.s32.totalorder 1, %s9
    %p126 = scmp.lt.s32.totalorder %s9, 3
    %p127 = pnand %p125, %p126
    %p128 = pneg %p127
    // Predicated region
    $region9: #{meta_conv_transpose2d.1} parent=5 // pred_check
      _
    $region10: #{meta_conv_transpose2d.1} parent=5 // pred_check_branch
      %130 = sbr.rel (%p127) target = $region12
    $region11: #{meta_conv_transpose2d.1} parent=5 // pred_region
      %s131 = ssub.s32 %s9, 1
      // Predicated region
      $region13: #{meta_conv_transpose2d.1} parent=11 // pred_check
        %p132 = pneg %p68
      $region14: #{meta_conv_transpose2d.1} parent=11 // pred_check_branch
        %134 = sbr.rel (%p132) target = $region16
      $region15: #{meta_conv_transpose2d.1} parent=11 // pred_region
        _
      $region16: #{meta_conv_transpose2d.1} parent=11 // pred_fallthru
        _
      // Predicated region
      $region17: #{meta_conv_transpose2d.1} parent=11 // pred_check
        %p135 = pneg %p89
      $region18: #{meta_conv_transpose2d.1} parent=11 // pred_check_branch
        %137 = sbr.rel (%p135) target = $region20
      $region19: #{meta_conv_transpose2d.1} parent=11 // pred_region
        _
      $region20: #{meta_conv_transpose2d.1} parent=11 // pred_fallthru
        _
    $region12: #{meta_conv_transpose2d.1} parent=5 // pred_fallthru
      _
    %p138 = scmp.lt.s32.totalorder %s9, 2
    // Predicated region
    $region21: #{meta_conv_transpose2d.1} parent=5 // pred_check
      %p139 = pneg %p138
    $region22: #{meta_conv_transpose2d.1} parent=5 // pred_check_branch
      %141 = sbr.rel (%p139) target = $region24
    $region23: #{meta_conv_transpose2d.1} parent=5 // pred_region
      // Predicated region
      $region25: #{meta_conv_transpose2d.1} parent=23 // pred_check
        %p142 = pneg %p41
      $region26: #{meta_conv_transpose2d.1} parent=23 // pred_check_branch
        %144 = sbr.rel (%p142) target = $region28
      $region27: #{meta_conv_transpose2d.1} parent=23 // pred_region
        %p145 = scmp.lt.s32.totalorder %s16, 1
        %s146 = scalar_select %p145, %s16, 1
        %s147 = smul.addr %s146, 51
        %s148 = smul.addr %s147, 8
        %s149 = scalar_lea.vmem %s0, %s148
      $region28: #{meta_conv_transpose2d.1} parent=23 // pred_fallthru
        _
    $region24: #{meta_conv_transpose2d.1} parent=5 // pred_fallthru
      _
    %p150 = scmp.le.s32.totalorder 1, %s9
    %p151 = scmp.lt.s32.totalorder %s9, 3
    %p152 = pnand %p150, %p151
    %p153 = pneg %p152
    // Predicated region
    $region29: #{meta_conv_transpose2d.1} parent=5 // pred_check
      _
    $region30: #{meta_conv_transpose2d.1} parent=5 // pred_check_branch
      %155 = sbr.rel (%p152) target = $region32
    $region31: #{meta_conv_transpose2d.1} parent=5 // pred_region
      %s156 = ssub.s32 %s9, 1
      %p157 = scmp.lt.s32.totalorder %s18, 1
      %s158 = scalar_select %p157, %s18, 1
      %s159 = smul.addr %s158, 51
      %s160 = smul.addr %s159, 8
      %s161 = scalar_lea.vmem %s0, %s160
      %p162 = pneg %p47
      %p163 = pneg %p44
      %p164 = pneg %p68
      %p165 = pneg %p65
      %p166 = pneg %p89
      %p167 = pneg %p86
      %p168 = pneg %p117
      %p169 = pneg %p114
      %s170 = smul.u32 16, %s19
      %p171 = scmp.lt.s32.totalorder %s18, 1
      %s172 = scalar_select %p171, %s18, 1
      %p173 = scmp.lt.s32.totalorder %s170, 15
      %s174 = scalar_select %p173, %s170, 15
      %s175 = smul.addr %s174, 2
      %s176 = smul.addr %s172, 32
      %s177 = sadd.s32 %s175, %s176
      %s178 = smul.addr %s177, 8
      %s179 = scalar_lea.vmem %s3, %s178
      %p180 = scmp.lt.s32.totalorder %s18, 1
      %s181 = scalar_select %p180, %s18, 1
      %s182 = smul.addr %s181, 51
      %s183 = smul.addr %s182, 8
      %s184 = scalar_lea.vmem %s0, %s183
      %s185 = smul.u32 16, %s19
      %p186 = scmp.lt.s32.totalorder %s18, 1
      %s187 = scalar_select %p186, %s18, 1
      %p188 = scmp.lt.s32.totalorder %s185, 15
      %s189 = scalar_select %p188, %s185, 15
      %s190 = smul.addr %s189, 2
      %s191 = smul.addr %s187, 32
      %s192 = sadd.s32 %s190, %s191
      %s193 = smul.addr %s192, 8
      %s194 = scalar_lea.vmem %s3, %s193
      %s195 = smul.u32 16, %s19
      %s196 = smul.u32 %s19, 16
      %s197 = smul.u32 %s196, 24
      %s198 = scalar_lea.vmem %s184, %s197
      %v199 = vld [vmem:[%s198] sm:$0xff]
      %v200 = vld [vmem:[%s198 + $0x8] sm:$0xff]
      %v201 = vld [vmem:[%s198 + $0x18] sm:$0xff]
      %v202 = vld [vmem:[%s198 + $0x20] sm:$0xff]
      %v203 = vld [vmem:[%s198 + $0x30] sm:$0xff]
      %v204 = vld [vmem:[%s198 + $0x38] sm:$0xff]
      %v205 = vld [vmem:[%s198 + $0x48] sm:$0xff]
      %v206 = vld [vmem:[%s198 + $0x50] sm:$0xff]
      %v207 = vld [vmem:[%s198 + $0x60] sm:$0xff]
      %v208 = vld [vmem:[%s198 + $0x68] sm:$0xff]
      %v209 = vld [vmem:[%s198 + $0x78] sm:$0xff]
      %v210 = vld [vmem:[%s198 + $0x80] sm:$0xff]
      %v211 = vld [vmem:[%s198 + $0x90] sm:$0xff]
      %v212 = vld [vmem:[%s198 + $0x98] sm:$0xff]
      %v213 = vld [vmem:[%s198 + $0xa8] sm:$0xff]
      %v214 = vld [vmem:[%s198 + $0xb0] sm:$0xff]
      %v215 = vld [vmem:[%s198 + $0xc0] sm:$0xff]
      %v216 = vld [vmem:[%s198 + $0xc8] sm:$0xff]
      %v217 = vld [vmem:[%s198 + $0xd8] sm:$0xff]
      %v218 = vld [vmem:[%s198 + $0xe0] sm:$0xff]
      %v219 = vld [vmem:[%s198 + $0xf0] sm:$0xff]
      %v220 = vld [vmem:[%s198 + $0xf8] sm:$0xff]
      %v221 = vld [vmem:[%s198 + $0x108] sm:$0xff]
      %v222 = vld [vmem:[%s198 + $0x110] sm:$0xff]
      %v223 = vld [vmem:[%s198 + $0x120] sm:$0xff]
      %v224 = vld [vmem:[%s198 + $0x128] sm:$0xff]
      %v225 = vld [vmem:[%s198 + $0x138] sm:$0xff]
      %v226 = vld [vmem:[%s198 + $0x140] sm:$0xff]
      %v227 = vld [vmem:[%s198 + $0x150] sm:$0xff]
      %v228 = vld [vmem:[%s198 + $0x158] sm:$0xff]
      %v229 = vld [vmem:[%s198 + $0x168] sm:$0xff]
      %v230 = vld [vmem:[%s198 + $0x170] sm:$0xff]
      %v231 = vld [vmem:[%s1] sm:$0xf]
      %v232 = vld [vmem:[%s198 + $0x1] sm:$0xff]
      %v233 = vld [vmem:[%s198 + $0x9] sm:$0xff]
      %v234 = vld [vmem:[%s198 + $0x19] sm:$0xff]
      %v235 = vld [vmem:[%s198 + $0x21] sm:$0xff]
      %v236 = vld [vmem:[%s198 + $0x31] sm:$0xff]
      %v237 = vld [vmem:[%s198 + $0x39] sm:$0xff]
      %v238 = vld [vmem:[%s198 + $0x49] sm:$0xff]
      %v239 = vld [vmem:[%s198 + $0x51] sm:$0xff]
      %v240 = vld [vmem:[%s198 + $0x61] sm:$0xff]
      %v241 = vld [vmem:[%s198 + $0x69] sm:$0xff]
      %v242 = vld [vmem:[%s198 + $0x79] sm:$0xff]
      %v243 = vld [vmem:[%s198 + $0x81] sm:$0xff]
      %v244 = vld [vmem:[%s198 + $0x91] sm:$0xff]
      %v245 = vld [vmem:[%s198 + $0x99] sm:$0xff]
      %v246 = vld [vmem:[%s198 + $0xa9] sm:$0xff]
      %v247 = vld [vmem:[%s198 + $0xb1] sm:$0xff]
      %v248 = vld [vmem:[%s198 + $0xc1] sm:$0xff]
      %v249 = vld [vmem:[%s198 + $0xc9] sm:$0xff]
      %v250 = vld [vmem:[%s198 + $0xd9] sm:$0xff]
      %v251 = vld [vmem:[%s198 + $0xe1] sm:$0xff]
      %v252 = vld [vmem:[%s198 + $0xf1] sm:$0xff]
      %v253 = vld [vmem:[%s198 + $0xf9] sm:$0xff]
      %v254 = vld [vmem:[%s198 + $0x109] sm:$0xff]
      %v255 = vld [vmem:[%s198 + $0x111] sm:$0xff]
      %v256 = vld [vmem:[%s198 + $0x121] sm:$0xff]
      %v257 = vld [vmem:[%s198 + $0x129] sm:$0xff]
      %v258 = vld [vmem:[%s198 + $0x139] sm:$0xff]
      %v259 = vld [vmem:[%s198 + $0x141] sm:$0xff]
      %v260 = vld [vmem:[%s198 + $0x151] sm:$0xff]
      %v261 = vld [vmem:[%s198 + $0x159] sm:$0xff]
      %v262 = vld [vmem:[%s198 + $0x169] sm:$0xff]
      %v263 = vld [vmem:[%s198 + $0x171] sm:$0xff]
      %s264 = scalar_lea.vmem %s1, 4
      %v265 = vld [vmem:[%s264] sm:$0xf]
      %vm266 = vcmask 31744
      %v268 = vsel %vm266, %v232, 0
      %v271 = vsel %vm266, %v233, 0
      %v274 = vsel %vm266, %v234, 0
      %v277 = vsel %vm266, %v235, 0
      %v280 = vsel %vm266, %v236, 0
      %v283 = vsel %vm266, %v237, 0
      %v286 = vsel %vm266, %v238, 0
      %v289 = vsel %vm266, %v239, 0
      %v292 = vsel %vm266, %v240, 0
      %v295 = vsel %vm266, %v241, 0
      %v298 = vsel %vm266, %v242, 0
      %v301 = vsel %vm266, %v243, 0
      %v304 = vsel %vm266, %v244, 0
      %v307 = vsel %vm266, %v245, 0
      %v310 = vsel %vm266, %v246, 0
      %v313 = vsel %vm266, %v247, 0
      %v316 = vsel %vm266, %v248, 0
      %v319 = vsel %vm266, %v249, 0
      %v322 = vsel %vm266, %v250, 0
      %v325 = vsel %vm266, %v251, 0
      %v328 = vsel %vm266, %v252, 0
      %v331 = vsel %vm266, %v253, 0
      %v334 = vsel %vm266, %v254, 0
      %v337 = vsel %vm266, %v255, 0
      %v340 = vsel %vm266, %v256, 0
      %v343 = vsel %vm266, %v257, 0
      %v346 = vsel %vm266, %v258, 0
      %v349 = vsel %vm266, %v259, 0
      %v352 = vsel %vm266, %v260, 0
      %v355 = vsel %vm266, %v261, 0
      %v358 = vsel %vm266, %v262, 0
      %v361 = vsel %vm266, %v263, 0
      %vm363 = vcmask 1043456
      %v365 = vsel %vm363, %v265, 0
      %367 = vmatprep.subr.mxu0 0.0
      %368 = vmatpush1.msra.mxu0 0.0
      %369 = vmatprep.subr.mxu0 0.0
      %370 = vmatpush1.msra.mxu0 0.0
      %371 = vmatprep.subr.mxu0 0.0
      %372 = vmatpush1.msra.mxu0 0.0
      %373 = vmatprep.subr.mxu0 0.0
      %374 = vmatpush1.msra.mxu0 0.0
      %375 = vmatprep.subr.mxu0 0.0
      %376 = vmatpush1.msra.mxu0 0.0
      %377 = vmatprep.subr.mxu0 0.0
      %378 = vmatpush1.msra.mxu0 0.0
      %379 = vmatprep.subr.mxu0 0.0
      %380 = vmatpush1.msra.mxu0 0.0
      %381 = vmatprep.subr.mxu0 0.0
      %382 = vmatpush1.msra.mxu0 0.0
      %383 = vmatprep.subr.mxu0 0.0
      %384 = vmatpush1.msra.mxu0 0.0
      %385 = vmatprep.subr.mxu0 0.0
      %386 = vmatpush1.msra.mxu0 0.0
      %387 = vmatprep.subr.mxu0 0.0
      %388 = vmatpush1.msra.mxu0 0.0
      %389 = vmatprep.subr.mxu0 0.0
      %390 = vmatpush1.msra.mxu0 0.0
      %391 = vmatprep.subr.mxu0 0.0
      %392 = vmatpush1.msra.mxu0 0.0
      %393 = vmatprep.subr.mxu0 0.0
      %394 = vmatpush1.msra.mxu0 0.0
      %395 = vmatprep.subr.mxu0 0.0
      %396 = vmatpush1.msra.mxu0 0.0
      %397 = vmatprep.subr.mxu0 0.0
      %398 = vmatpush1.msra.mxu0 %v365
      %399 = vmatprep.subr.mxu0 0.0
      %400 = vmatpush2.msra.mxu0 0.0
      %401 = vmatprep.subr.mxu0 0.0
      %402 = vmatpush2.msra.mxu0 0.0
      %403 = vmatprep.subr.mxu0 0.0
      %404 = vmatpush2.msra.mxu0 0.0
      %405 = vmatprep.subr.mxu0 0.0
      %406 = vmatpush2.msra.mxu0 0.0
      %407 = vmatprep.subr.mxu0 0.0
      %408 = vmatpush2.msra.mxu0 0.0
      %409 = vmatprep.subr.mxu0 0.0
      %410 = vmatpush2.msra.mxu0 0.0
      %411 = vmatprep.subr.mxu0 0.0
      %412 = vmatpush2.msra.mxu0 0.0
      %413 = vmatprep.subr.mxu0 0.0
      %414 = vmatpush2.msra.mxu0 0.0
      %415 = vmatprep.subr.mxu0 0.0
      %416 = vmatpush2.msra.mxu0 0.0
      %417 = vmatprep.subr.mxu0 0.0
      %418 = vmatpush2.msra.mxu0 0.0
      %419 = vmatprep.subr.mxu0 0.0
      %420 = vmatpush2.msra.mxu0 0.0
      %421 = vmatprep.subr.mxu0 0.0
      %422 = vmatpush2.msra.mxu0 0.0
      %423 = vmatprep.subr.mxu0 0.0
      %424 = vmatpush2.msra.mxu0 0.0
      %425 = vmatprep.subr.mxu0 0.0
      %426 = vmatpush2.msra.mxu0 0.0
      %427 = vmatprep.subr.mxu0 0.0
      %428 = vmatpush2.msra.mxu0 0.0
      %429 = vmatprep.subr.mxu0 0.0
      %430 = vmatpush2.msra.mxu0 0.0
      %431 = vmatprep.mubr.f32.mxu0 0.0
      %432 = vmatmul.mubr.f32.gmra.mxu0 %v268
      %v433 = vpop.f32.mrf.mxu0
      %v434 = vadd.f32 0.0, %v433
      %v435 = vpop.f32.mrf.mxu0
      %436 = vmatprep.mubr.f32.mxu0 0.0
      %437 = vmatmul.mubr.f32.gmra.mxu0 %v271
      %v438 = vpop.f32.mrf.mxu0
      %v439 = vadd.f32 0.0, %v438
      %v440 = vpop.f32.mrf.mxu0
      %441 = vmatprep.mubr.f32.mxu0 0.0
      %442 = vmatmul.mubr.f32.gmra.mxu0 %v274
      %v443 = vpop.f32.mrf.mxu0
      %v444 = vadd.f32 0.0, %v443
      %v445 = vpop.f32.mrf.mxu0
      %446 = vmatprep.mubr.f32.mxu0 0.0
      %447 = vmatmul.mubr.f32.gmra.mxu0 %v277
      %v448 = vpop.f32.mrf.mxu0
      %v449 = vadd.f32 0.0, %v448
      %v450 = vpop.f32.mrf.mxu0
      %451 = vmatprep.mubr.f32.mxu0 0.0
      %452 = vmatmul.mubr.f32.gmra.mxu0 %v280
      %v453 = vpop.f32.mrf.mxu0
      %v454 = vadd.f32 0.0, %v453
      %v455 = vpop.f32.mrf.mxu0
      %456 = vmatprep.mubr.f32.mxu0 0.0
      %457 = vmatmul.mubr.f32.gmra.mxu0 %v283
      %v458 = vpop.f32.mrf.mxu0
      %v459 = vadd.f32 0.0, %v458
      %v460 = vpop.f32.mrf.mxu0
      %461 = vmatprep.mubr.f32.mxu0 0.0
      %462 = vmatmul.mubr.f32.gmra.mxu0 %v286
      %v463 = vpop.f32.mrf.mxu0
      %v464 = vadd.f32 0.0, %v463
      %v465 = vpop.f32.mrf.mxu0
      %466 = vmatprep.mubr.f32.mxu0 0.0
      %467 = vmatmul.mubr.f32.gmra.mxu0 %v289
      %v468 = vpop.f32.mrf.mxu0
      %v469 = vadd.f32 0.0, %v468
      %v470 = vpop.f32.mrf.mxu0
      %471 = vmatprep.mubr.f32.mxu0 0.0
      %472 = vmatmul.mubr.f32.gmra.mxu0 %v292
      %v473 = vpop.f32.mrf.mxu0
      %v474 = vadd.f32 0.0, %v473
      %v475 = vpop.f32.mrf.mxu0
      %476 = vmatprep.mubr.f32.mxu0 0.0
      %477 = vmatmul.mubr.f32.gmra.mxu0 %v295
      %v478 = vpop.f32.mrf.mxu0
      %v479 = vadd.f32 0.0, %v478
      %v480 = vpop.f32.mrf.mxu0
      %481 = vmatprep.mubr.f32.mxu0 0.0
      %482 = vmatmul.mubr.f32.gmra.mxu0 %v298
      %v483 = vpop.f32.mrf.mxu0
      %v484 = vadd.f32 0.0, %v483
      %v485 = vpop.f32.mrf.mxu0
      %486 = vmatprep.mubr.f32.mxu0 0.0
      %487 = vmatmul.mubr.f32.gmra.mxu0 %v301
      %v488 = vpop.f32.mrf.mxu0
      %v489 = vadd.f32 0.0, %v488
      %v490 = vpop.f32.mrf.mxu0
      %491 = vmatprep.mubr.f32.mxu0 0.0
      %492 = vmatmul.mubr.f32.gmra.mxu0 %v304
      %v493 = vpop.f32.mrf.mxu0
      %v494 = vadd.f32 0.0, %v493
      %v495 = vpop.f32.mrf.mxu0
      %496 = vmatprep.mubr.f32.mxu0 0.0
      %497 = vmatmul.mubr.f32.gmra.mxu0 %v307
      %v498 = vpop.f32.mrf.mxu0
      %v499 = vadd.f32 0.0, %v498
      %v500 = vpop.f32.mrf.mxu0
      %501 = vmatprep.mubr.f32.mxu0 0.0
      %502 = vmatmul.mubr.f32.gmra.mxu0 %v310
      %v503 = vpop.f32.mrf.mxu0
      %v504 = vadd.f32 0.0, %v503
      %v505 = vpop.f32.mrf.mxu0
      %506 = vmatprep.mubr.f32.mxu0 0.0
      %507 = vmatmul.mubr.f32.gmra.mxu0 %v313
      %v508 = vpop.f32.mrf.mxu0
      %v509 = vadd.f32 0.0, %v508
      %v510 = vpop.f32.mrf.mxu0
      %511 = vmatprep.mubr.f32.mxu0 0.0
      %512 = vmatmul.mubr.f32.gmra.mxu0 %v316
      %v513 = vpop.f32.mrf.mxu0
      %v514 = vadd.f32 0.0, %v513
      %v515 = vpop.f32.mrf.mxu0
      %516 = vmatprep.mubr.f32.mxu0 0.0
      %517 = vmatmul.mubr.f32.gmra.mxu0 %v319
      %v518 = vpop.f32.mrf.mxu0
      %v519 = vadd.f32 0.0, %v518
      %v520 = vpop.f32.mrf.mxu0
      %521 = vmatprep.mubr.f32.mxu0 0.0
      %522 = vmatmul.mubr.f32.gmra.mxu0 %v322
      %v523 = vpop.f32.mrf.mxu0
      %v524 = vadd.f32 0.0, %v523
      %v525 = vpop.f32.mrf.mxu0
      %526 = vmatprep.mubr.f32.mxu0 0.0
      %527 = vmatmul.mubr.f32.gmra.mxu0 %v325
      %v528 = vpop.f32.mrf.mxu0
      %v529 = vadd.f32 0.0, %v528
      %v530 = vpop.f32.mrf.mxu0
      %531 = vmatprep.mubr.f32.mxu0 0.0
      %532 = vmatmul.mubr.f32.gmra.mxu0 %v328
      %v533 = vpop.f32.mrf.mxu0
      %v534 = vadd.f32 0.0, %v533
      %v535 = vpop.f32.mrf.mxu0
      %536 = vmatprep.mubr.f32.mxu0 0.0
      %537 = vmatmul.mubr.f32.gmra.mxu0 %v331
      %v538 = vpop.f32.mrf.mxu0
      %v539 = vadd.f32 0.0, %v538
      %v540 = vpop.f32.mrf.mxu0
      %541 = vmatprep.mubr.f32.mxu0 0.0
      %542 = vmatmul.mubr.f32.gmra.mxu0 %v334
      %v543 = vpop.f32.mrf.mxu0
      %v544 = vadd.f32 0.0, %v543
      %v545 = vpop.f32.mrf.mxu0
      %546 = vmatprep.mubr.f32.mxu0 0.0
      %547 = vmatmul.mubr.f32.gmra.mxu0 %v337
      %v548 = vpop.f32.mrf.mxu0
      %v549 = vadd.f32 0.0, %v548
      %v550 = vpop.f32.mrf.mxu0
      %551 = vmatprep.mubr.f32.mxu0 0.0
      %552 = vmatmul.mubr.f32.gmra.mxu0 %v340
      %v553 = vpop.f32.mrf.mxu0
      %v554 = vadd.f32 0.0, %v553
      %v555 = vpop.f32.mrf.mxu0
      %556 = vmatprep.mubr.f32.mxu0 0.0
      %557 = vmatmul.mubr.f32.gmra.mxu0 %v343
      %v558 = vpop.f32.mrf.mxu0
      %v559 = vadd.f32 0.0, %v558
      %v560 = vpop.f32.mrf.mxu0
      %561 = vmatprep.mubr.f32.mxu0 0.0
      %562 = vmatmul.mubr.f32.gmra.mxu0 %v346
      %v563 = vpop.f32.mrf.mxu0
      %v564 = vadd.f32 0.0, %v563
      %v565 = vpop.f32.mrf.mxu0
      %566 = vmatprep.mubr.f32.mxu0 0.0
      %567 = vmatmul.mubr.f32.gmra.mxu0 %v349
      %v568 = vpop.f32.mrf.mxu0
      %v569 = vadd.f32 0.0, %v568
      %v570 = vpop.f32.mrf.mxu0
      %571 = vmatprep.mubr.f32.mxu0 0.0
      %572 = vmatmul.mubr.f32.gmra.mxu0 %v352
      %v573 = vpop.f32.mrf.mxu0
      %v574 = vadd.f32 0.0, %v573
      %v575 = vpop.f32.mrf.mxu0
      %576 = vmatprep.mubr.f32.mxu0 0.0
      %577 = vmatmul.mubr.f32.gmra.mxu0 %v355
      %v578 = vpop.f32.mrf.mxu0
      %v579 = vadd.f32 0.0, %v578
      %v580 = vpop.f32.mrf.mxu0
      %581 = vmatprep.mubr.f32.mxu0 0.0
      %582 = vmatmul.mubr.f32.gmra.mxu0 %v358
      %v583 = vpop.f32.mrf.mxu0
      %v584 = vadd.f32 0.0, %v583
      %v585 = vpop.f32.mrf.mxu0
      %586 = vmatprep.mubr.f32.mxu0 0.0
      %587 = vmatmul.mubr.f32.gmra.mxu0 %v361
      %v588 = vpop.f32.mrf.mxu0
      %v589 = vadd.f32 0.0, %v588
      %v590 = vpop.f32.mrf.mxu0
      %591 = vdwg.mxu0
      %v593 = vsel %vm266, %v199, 0
      %v596 = vsel %vm266, %v200, 0
      %v599 = vsel %vm266, %v201, 0
      %v602 = vsel %vm266, %v202, 0
      %v605 = vsel %vm266, %v203, 0
      %v608 = vsel %vm266, %v204, 0
      %v611 = vsel %vm266, %v205, 0
      %v614 = vsel %vm266, %v206, 0
      %v617 = vsel %vm266, %v207, 0
      %v620 = vsel %vm266, %v208, 0
      %v623 = vsel %vm266, %v209, 0
      %v626 = vsel %vm266, %v210, 0
      %v629 = vsel %vm266, %v211, 0
      %v632 = vsel %vm266, %v212, 0
      %v635 = vsel %vm266, %v213, 0
      %v638 = vsel %vm266, %v214, 0
      %v641 = vsel %vm266, %v215, 0
      %v644 = vsel %vm266, %v216, 0
      %v647 = vsel %vm266, %v217, 0
      %v650 = vsel %vm266, %v218, 0
      %v653 = vsel %vm266, %v219, 0
      %v656 = vsel %vm266, %v220, 0
      %v659 = vsel %vm266, %v221, 0
      %v662 = vsel %vm266, %v222, 0
      %v665 = vsel %vm266, %v223, 0
      %v668 = vsel %vm266, %v224, 0
      %v671 = vsel %vm266, %v225, 0
      %v674 = vsel %vm266, %v226, 0
      %v677 = vsel %vm266, %v227, 0
      %v680 = vsel %vm266, %v228, 0
      %v683 = vsel %vm266, %v229, 0
      %v686 = vsel %vm266, %v230, 0
      %v689 = vsel %vm363, %v231, 0
      %691 = vmatprep.subr.mxu0 0.0
      %692 = vmatpush1.msra.mxu0 0.0
      %693 = vmatprep.subr.mxu0 0.0
      %694 = vmatpush1.msra.mxu0 0.0
      %695 = vmatprep.subr.mxu0 0.0
      %696 = vmatpush1.msra.mxu0 0.0
      %697 = vmatprep.subr.mxu0 0.0
      %698 = vmatpush1.msra.mxu0 0.0
      %699 = vmatprep.subr.mxu0 0.0
      %700 = vmatpush1.msra.mxu0 0.0
      %701 = vmatprep.subr.mxu0 0.0
      %702 = vmatpush1.msra.mxu0 0.0
      %703 = vmatprep.subr.mxu0 0.0
      %704 = vmatpush1.msra.mxu0 0.0
      %705 = vmatprep.subr.mxu0 0.0
      %706 = vmatpush1.msra.mxu0 0.0
      %707 = vmatprep.subr.mxu0 0.0
      %708 = vmatpush1.msra.mxu0 0.0
      %709 = vmatprep.subr.mxu0 0.0
      %710 = vmatpush1.msra.mxu0 0.0
      %711 = vmatprep.subr.mxu0 0.0
      %712 = vmatpush1.msra.mxu0 0.0
      %713 = vmatprep.subr.mxu0 0.0
      %714 = vmatpush1.msra.mxu0 0.0
      %715 = vmatprep.subr.mxu0 0.0
      %716 = vmatpush1.msra.mxu0 0.0
      %717 = vmatprep.subr.mxu0 0.0
      %718 = vmatpush1.msra.mxu0 0.0
      %719 = vmatprep.subr.mxu0 0.0
      %720 = vmatpush1.msra.mxu0 0.0
      %721 = vmatprep.subr.mxu0 0.0
      %722 = vmatpush1.msra.mxu0 %v689
      %723 = vmatprep.subr.mxu0 0.0
      %724 = vmatpush2.msra.mxu0 0.0
      %725 = vmatprep.subr.mxu0 0.0
      %726 = vmatpush2.msra.mxu0 0.0
      %727 = vmatprep.subr.mxu0 0.0
      %728 = vmatpush2.msra.mxu0 0.0
      %729 = vmatprep.subr.mxu0 0.0
      %730 = vmatpush2.msra.mxu0 0.0
      %731 = vmatprep.subr.mxu0 0.0
      %732 = vmatpush2.msra.mxu0 0.0
      %733 = vmatprep.subr.mxu0 0.0
      %734 = vmatpush2.msra.mxu0 0.0
      %735 = vmatprep.subr.mxu0 0.0
      %736 = vmatpush2.msra.mxu0 0.0
      %737 = vmatprep.subr.mxu0 0.0
      %738 = vmatpush2.msra.mxu0 0.0
      %739 = vmatprep.subr.mxu0 0.0
      %740 = vmatpush2.msra.mxu0 0.0
      %741 = vmatprep.subr.mxu0 0.0
      %742 = vmatpush2.msra.mxu0 0.0
      %743 = vmatprep.subr.mxu0 0.0
      %744 = vmatpush2.msra.mxu0 0.0
      %745 = vmatprep.subr.mxu0 0.0
      %746 = vmatpush2.msra.mxu0 0.0
      %747 = vmatprep.subr.mxu0 0.0
      %748 = vmatpush2.msra.mxu0 0.0
      %749 = vmatprep.subr.mxu0 0.0
      %750 = vmatpush2.msra.mxu0 0.0
      %751 = vmatprep.subr.mxu0 0.0
      %752 = vmatpush2.msra.mxu0 0.0
      %753 = vmatprep.subr.mxu0 0.0
      %754 = vmatpush2.msra.mxu0 0.0
      %755 = vmatprep.mubr.f32.mxu0 0.0
      %756 = vmatmul.mubr.f32.gmra.mxu0 %v593
      %v757 = vpop.f32.mrf.mxu0
      %v758 = vadd.f32 %v434, %v757
      %v759 = vpop.f32.mrf.mxu0
      %760 = vmatprep.mubr.f32.mxu0 0.0
      %761 = vmatmul.mubr.f32.gmra.mxu0 %v596
      %v762 = vpop.f32.mrf.mxu0
      %v763 = vadd.f32 %v439, %v762
      %v764 = vpop.f32.mrf.mxu0
      %765 = vmatprep.mubr.f32.mxu0 0.0
      %766 = vmatmul.mubr.f32.gmra.mxu0 %v599
      %v767 = vpop.f32.mrf.mxu0
      %v768 = vadd.f32 %v444, %v767
      %v769 = vpop.f32.mrf.mxu0
      %770 = vmatprep.mubr.f32.mxu0 0.0
      %771 = vmatmul.mubr.f32.gmra.mxu0 %v602
      %v772 = vpop.f32.mrf.mxu0
      %v773 = vadd.f32 %v449, %v772
      %v774 = vpop.f32.mrf.mxu0
      %775 = vmatprep.mubr.f32.mxu0 0.0
      %776 = vmatmul.mubr.f32.gmra.mxu0 %v605
      %v777 = vpop.f32.mrf.mxu0
      %v778 = vadd.f32 %v454, %v777
      %v779 = vpop.f32.mrf.mxu0
      %780 = vmatprep.mubr.f32.mxu0 0.0
      %781 = vmatmul.mubr.f32.gmra.mxu0 %v608
      %v782 = vpop.f32.mrf.mxu0
      %v783 = vadd.f32 %v459, %v782
      %v784 = vpop.f32.mrf.mxu0
      %785 = vmatprep.mubr.f32.mxu0 0.0
      %786 = vmatmul.mubr.f32.gmra.mxu0 %v611
      %v787 = vpop.f32.mrf.mxu0
      %v788 = vadd.f32 %v464, %v787
      %v789 = vpop.f32.mrf.mxu0
      %790 = vmatprep.mubr.f32.mxu0 0.0
      %791 = vmatmul.mubr.f32.gmra.mxu0 %v614
      %v792 = vpop.f32.mrf.mxu0
      %v793 = vadd.f32 %v469, %v792
      %v794 = vpop.f32.mrf.mxu0
      %795 = vmatprep.mubr.f32.mxu0 0.0
      %796 = vmatmul.mubr.f32.gmra.mxu0 %v617
      %v797 = vpop.f32.mrf.mxu0
      %v798 = vadd.f32 %v474, %v797
      %v799 = vpop.f32.mrf.mxu0
      %800 = vmatprep.mubr.f32.mxu0 0.0
      %801 = vmatmul.mubr.f32.gmra.mxu0 %v620
      %v802 = vpop.f32.mrf.mxu0
      %v803 = vadd.f32 %v479, %v802
      %v804 = vpop.f32.mrf.mxu0
      %805 = vmatprep.mubr.f32.mxu0 0.0
      %806 = vmatmul.mubr.f32.gmra.mxu0 %v623
      %v807 = vpop.f32.mrf.mxu0
      %v808 = vadd.f32 %v484, %v807
      %v809 = vpop.f32.mrf.mxu0
      %810 = vmatprep.mubr.f32.mxu0 0.0
      %811 = vmatmul.mubr.f32.gmra.mxu0 %v626
      %v812 = vpop.f32.mrf.mxu0
      %v813 = vadd.f32 %v489, %v812
      %v814 = vpop.f32.mrf.mxu0
      %815 = vmatprep.mubr.f32.mxu0 0.0
      %816 = vmatmul.mubr.f32.gmra.mxu0 %v629
      %v817 = vpop.f32.mrf.mxu0
      %v818 = vadd.f32 %v494, %v817
      %v819 = vpop.f32.mrf.mxu0
      %820 = vmatprep.mubr.f32.mxu0 0.0
      %821 = vmatmul.mubr.f32.gmra.mxu0 %v632
      %v822 = vpop.f32.mrf.mxu0
      %v823 = vadd.f32 %v499, %v822
      %v824 = vpop.f32.mrf.mxu0
      %825 = vmatprep.mubr.f32.mxu0 0.0
      %826 = vmatmul.mubr.f32.gmra.mxu0 %v635
      %v827 = vpop.f32.mrf.mxu0
      %v828 = vadd.f32 %v504, %v827
      %v829 = vpop.f32.mrf.mxu0
      %830 = vmatprep.mubr.f32.mxu0 0.0
      %831 = vmatmul.mubr.f32.gmra.mxu0 %v638
      %v832 = vpop.f32.mrf.mxu0
      %v833 = vadd.f32 %v509, %v832
      %v834 = vpop.f32.mrf.mxu0
      %835 = vmatprep.mubr.f32.mxu0 0.0
      %836 = vmatmul.mubr.f32.gmra.mxu0 %v641
      %v837 = vpop.f32.mrf.mxu0
      %v838 = vadd.f32 %v514, %v837
      %v839 = vpop.f32.mrf.mxu0
      %840 = vmatprep.mubr.f32.mxu0 0.0
      %841 = vmatmul.mubr.f32.gmra.mxu0 %v644
      %v842 = vpop.f32.mrf.mxu0
      %v843 = vadd.f32 %v519, %v842
      %v844 = vpop.f32.mrf.mxu0
      %845 = vmatprep.mubr.f32.mxu0 0.0
      %846 = vmatmul.mubr.f32.gmra.mxu0 %v647
      %v847 = vpop.f32.mrf.mxu0
      %v848 = vadd.f32 %v524, %v847
      %v849 = vpop.f32.mrf.mxu0
      %850 = vmatprep.mubr.f32.mxu0 0.0
      %851 = vmatmul.mubr.f32.gmra.mxu0 %v650
      %v852 = vpop.f32.mrf.mxu0
      %v853 = vadd.f32 %v529, %v852
      %v854 = vpop.f32.mrf.mxu0
      %855 = vmatprep.mubr.f32.mxu0 0.0
      %856 = vmatmul.mubr.f32.gmra.mxu0 %v653
      %v857 = vpop.f32.mrf.mxu0
      %v858 = vadd.f32 %v534, %v857
      %v859 = vpop.f32.mrf.mxu0
      %860 = vmatprep.mubr.f32.mxu0 0.0
      %861 = vmatmul.mubr.f32.gmra.mxu0 %v656
      %v862 = vpop.f32.mrf.mxu0
      %v863 = vadd.f32 %v539, %v862
      %v864 = vpop.f32.mrf.mxu0
      %865 = vmatprep.mubr.f32.mxu0 0.0
      %866 = vmatmul.mubr.f32.gmra.mxu0 %v659
      %v867 = vpop.f32.mrf.mxu0
      %v868 = vadd.f32 %v544, %v867
      %v869 = vpop.f32.mrf.mxu0
      %870 = vmatprep.mubr.f32.mxu0 0.0
      %871 = vmatmul.mubr.f32.gmra.mxu0 %v662
      %v872 = vpop.f32.mrf.mxu0
      %v873 = vadd.f32 %v549, %v872
      %v874 = vpop.f32.mrf.mxu0
      %875 = vmatprep.mubr.f32.mxu0 0.0
      %876 = vmatmul.mubr.f32.gmra.mxu0 %v665
      %v877 = vpop.f32.mrf.mxu0
      %v878 = vadd.f32 %v554, %v877
      %v879 = vpop.f32.mrf.mxu0
      %880 = vmatprep.mubr.f32.mxu0 0.0
      %881 = vmatmul.mubr.f32.gmra.mxu0 %v668
      %v882 = vpop.f32.mrf.mxu0
      %v883 = vadd.f32 %v559, %v882
      %v884 = vpop.f32.mrf.mxu0
      %885 = vmatprep.mubr.f32.mxu0 0.0
      %886 = vmatmul.mubr.f32.gmra.mxu0 %v671
      %v887 = vpop.f32.mrf.mxu0
      %v888 = vadd.f32 %v564, %v887
      %v889 = vpop.f32.mrf.mxu0
      %890 = vmatprep.mubr.f32.mxu0 0.0
      %891 = vmatmul.mubr.f32.gmra.mxu0 %v674
      %v892 = vpop.f32.mrf.mxu0
      %v893 = vadd.f32 %v569, %v892
      %v894 = vpop.f32.mrf.mxu0
      %895 = vmatprep.mubr.f32.mxu0 0.0
      %896 = vmatmul.mubr.f32.gmra.mxu0 %v677
      %v897 = vpop.f32.mrf.mxu0
      %v898 = vadd.f32 %v574, %v897
      %v899 = vpop.f32.mrf.mxu0
      %900 = vmatprep.mubr.f32.mxu0 0.0
      %901 = vmatmul.mubr.f32.gmra.mxu0 %v680
      %v902 = vpop.f32.mrf.mxu0
      %v903 = vadd.f32 %v579, %v902
      %v904 = vpop.f32.mrf.mxu0
      %905 = vmatprep.mubr.f32.mxu0 0.0
      %906 = vmatmul.mubr.f32.gmra.mxu0 %v683
      %v907 = vpop.f32.mrf.mxu0
      %v908 = vadd.f32 %v584, %v907
      %v909 = vpop.f32.mrf.mxu0
      %910 = vmatprep.mubr.f32.mxu0 0.0
      %911 = vmatmul.mubr.f32.gmra.mxu0 %v686
      %v912 = vpop.f32.mrf.mxu0
      %v913 = vadd.f32 %v589, %v912
      %v914 = vpop.f32.mrf.mxu0
      %915 = vdwg.mxu0
      %s916 = sadd.s32 %s196, 1
      %s917 = smul.u32 %s916, 24
      %s918 = scalar_lea.vmem %s184, %s917
      %v919 = vld [vmem:[%s918] sm:$0xff]
      %v920 = vld [vmem:[%s918 + $0x8] sm:$0xff]
      %v921 = vld [vmem:[%s918 + $0x18] sm:$0xff]
      %v922 = vld [vmem:[%s918 + $0x20] sm:$0xff]
      %v923 = vld [vmem:[%s918 + $0x30] sm:$0xff]
      %v924 = vld [vmem:[%s918 + $0x38] sm:$0xff]
      %v925 = vld [vmem:[%s918 + $0x48] sm:$0xff]
      %v926 = vld [vmem:[%s918 + $0x50] sm:$0xff]
      %v927 = vld [vmem:[%s918 + $0x60] sm:$0xff]
      %v928 = vld [vmem:[%s918 + $0x68] sm:$0xff]
      %v929 = vld [vmem:[%s918 + $0x78] sm:$0xff]
      %v930 = vld [vmem:[%s918 + $0x80] sm:$0xff]
      %v931 = vld [vmem:[%s918 + $0x90] sm:$0xff]
      %v932 = vld [vmem:[%s918 + $0x98] sm:$0xff]
      %v933 = vld [vmem:[%s918 + $0xa8] sm:$0xff]
      %v934 = vld [vmem:[%s918 + $0xb0] sm:$0xff]
      %v935 = vld [vmem:[%s918 + $0xc0] sm:$0xff]
      %v936 = vld [vmem:[%s918 + $0xc8] sm:$0xff]
      %v937 = vld [vmem:[%s918 + $0xd8] sm:$0xff]
      %v938 = vld [vmem:[%s918 + $0xe0] sm:$0xff]
      %v939 = vld [vmem:[%s918 + $0xf0] sm:$0xff]
      %v940 = vld [vmem:[%s918 + $0xf8] sm:$0xff]
      %v941 = vld [vmem:[%s918 + $0x108] sm:$0xff]
      %v942 = vld [vmem:[%s918 + $0x110] sm:$0xff]
      %v943 = vld [vmem:[%s918 + $0x120] sm:$0xff]
      %v944 = vld [vmem:[%s918 + $0x128] sm:$0xff]
      %v945 = vld [vmem:[%s918 + $0x138] sm:$0xff]
      %v946 = vld [vmem:[%s918 + $0x140] sm:$0xff]
      %v947 = vld [vmem:[%s918 + $0x150] sm:$0xff]
      %v948 = vld [vmem:[%s918 + $0x158] sm:$0xff]
      %v949 = vld [vmem:[%s918 + $0x168] sm:$0xff]
      %v950 = vld [vmem:[%s918 + $0x170] sm:$0xff]
      %s951 = scalar_lea.vmem %s1, 8
      %v952 = vld [vmem:[%s951] sm:$0xf]
      %v954 = vsel %vm266, %v919, 0
      %v957 = vsel %vm266, %v920, 0
      %v960 = vsel %vm266, %v921, 0
      %v963 = vsel %vm266, %v922, 0
      %v966 = vsel %vm266, %v923, 0
      %v969 = vsel %vm266, %v924, 0
      %v972 = vsel %vm266, %v925, 0
      %v975 = vsel %vm266, %v926, 0
      %v978 = vsel %vm266, %v927, 0
      %v981 = vsel %vm266, %v928, 0
      %v984 = vsel %vm266, %v929, 0
      %v987 = vsel %vm266, %v930, 0
      %v990 = vsel %vm266, %v931, 0
      %v993 = vsel %vm266, %v932, 0
      %v996 = vsel %vm266, %v933, 0
      %v999 = vsel %vm266, %v934, 0
      %v1002 = vsel %vm266, %v935, 0
      %v1005 = vsel %vm266, %v936, 0
      %v1008 = vsel %vm266, %v937, 0
      %v1011 = vsel %vm266, %v938, 0
      %v1014 = vsel %vm266, %v939, 0
      %v1017 = vsel %vm266, %v940, 0
      %v1020 = vsel %vm266, %v941, 0
      %v1023 = vsel %vm266, %v942, 0
      %v1026 = vsel %vm266, %v943, 0
      %v1029 = vsel %vm266, %v944, 0
      %v1032 = vsel %vm266, %v945, 0
      %v1035 = vsel %vm266, %v946, 0
      %v1038 = vsel %vm266, %v947, 0
      %v1041 = vsel %vm266, %v948, 0
      %v1044 = vsel %vm266, %v949, 0
      %v1047 = vsel %vm266, %v950, 0
      %v1050 = vsel %vm363, %v952, 0
      %1052 = vmatprep.subr.mxu0 0.0
      %1053 = vmatpush1.msra.mxu0 0.0
      %1054 = vmatprep.subr.mxu0 0.0
      %1055 = vmatpush1.msra.mxu0 0.0
      %1056 = vmatprep.subr.mxu0 0.0
      %1057 = vmatpush1.msra.mxu0 0.0
      %1058 = vmatprep.subr.mxu0 0.0
      %1059 = vmatpush1.msra.mxu0 0.0
      %1060 = vmatprep.subr.mxu0 0.0
      %1061 = vmatpush1.msra.mxu0 0.0
      %1062 = vmatprep.subr.mxu0 0.0
      %1063 = vmatpush1.msra.mxu0 0.0
      %1064 = vmatprep.subr.mxu0 0.0
      %1065 = vmatpush1.msra.mxu0 0.0
      %1066 = vmatprep.subr.mxu0 0.0
      %1067 = vmatpush1.msra.mxu0 0.0
      %1068 = vmatprep.subr.mxu0 0.0
      %1069 = vmatpush1.msra.mxu0 0.0
      %1070 = vmatprep.subr.mxu0 0.0
      %1071 = vmatpush1.msra.mxu0 0.0
      %1072 = vmatprep.subr.mxu0 0.0
      %1073 = vmatpush1.msra.mxu0 0.0
      %1074 = vmatprep.subr.mxu0 0.0
      %1075 = vmatpush1.msra.mxu0 0.0
      %1076 = vmatprep.subr.mxu0 0.0
      %1077 = vmatpush1.msra.mxu0 0.0
      %1078 = vmatprep.subr.mxu0 0.0
      %1079 = vmatpush1.msra.mxu0 0.0
      %1080 = vmatprep.subr.mxu0 0.0
      %1081 = vmatpush1.msra.mxu0 0.0
      %1082 = vmatprep.subr.mxu0 0.0
      %1083 = vmatpush1.msra.mxu0 %v1050
      %1084 = vmatprep.subr.mxu0 0.0
      %1085 = vmatpush2.msra.mxu0 0.0
      %1086 = vmatprep.subr.mxu0 0.0
      %1087 = vmatpush2.msra.mxu0 0.0
      %1088 = vmatprep.subr.mxu0 0.0
      %1089 = vmatpush2.msra.mxu0 0.0
      %1090 = vmatprep.subr.mxu0 0.0
      %1091 = vmatpush2.msra.mxu0 0.0
      %1092 = vmatprep.subr.mxu0 0.0
      %1093 = vmatpush2.msra.mxu0 0.0
      %1094 = vmatprep.subr.mxu0 0.0
      %1095 = vmatpush2.msra.mxu0 0.0
      %1096 = vmatprep.subr.mxu0 0.0
      %1097 = vmatpush2.msra.mxu0 0.0
      %1098 = vmatprep.subr.mxu0 0.0
      %1099 = vmatpush2.msra.mxu0 0.0
      %1100 = vmatprep.subr.mxu0 0.0
      %1101 = vmatpush2.msra.mxu0 0.0
      %1102 = vmatprep.subr.mxu0 0.0
      %1103 = vmatpush2.msra.mxu0 0.0
      %1104 = vmatprep.subr.mxu0 0.0
      %1105 = vmatpush2.msra.mxu0 0.0
      %1106 = vmatprep.subr.mxu0 0.0
      %1107 = vmatpush2.msra.mxu0 0.0
      %1108 = vmatprep.subr.mxu0 0.0
      %1109 = vmatpush2.msra.mxu0 0.0
      %1110 = vmatprep.subr.mxu0 0.0
      %1111 = vmatpush2.msra.mxu0 0.0
      %1112 = vmatprep.subr.mxu0 0.0
      %1113 = vmatpush2.msra.mxu0 0.0
      %1114 = vmatprep.subr.mxu0 0.0
      %1115 = vmatpush2.msra.mxu0 0.0
      %1116 = vmatprep.mubr.f32.mxu0 0.0
      %1117 = vmatmul.mubr.f32.gmra.mxu0 %v954
      %v1118 = vpop.f32.mrf.mxu0
      %v1119 = vadd.f32 0.0, %v1118
      %v1120 = vpop.f32.mrf.mxu0
      %1121 = vmatprep.mubr.f32.mxu0 0.0
      %1122 = vmatmul.mubr.f32.gmra.mxu0 %v957
      %v1123 = vpop.f32.mrf.mxu0
      %v1124 = vadd.f32 0.0, %v1123
      %v1125 = vpop.f32.mrf.mxu0
      %1126 = vmatprep.mubr.f32.mxu0 0.0
      %1127 = vmatmul.mubr.f32.gmra.mxu0 %v960
      %v1128 = vpop.f32.mrf.mxu0
      %v1129 = vadd.f32 0.0, %v1128
      %v1130 = vpop.f32.mrf.mxu0
      %1131 = vmatprep.mubr.f32.mxu0 0.0
      %1132 = vmatmul.mubr.f32.gmra.mxu0 %v963
      %v1133 = vpop.f32.mrf.mxu0
      %v1134 = vadd.f32 0.0, %v1133
      %v1135 = vpop.f32.mrf.mxu0
      %1136 = vmatprep.mubr.f32.mxu0 0.0
      %1137 = vmatmul.mubr.f32.gmra.mxu0 %v966
      %v1138 = vpop.f32.mrf.mxu0
      %v1139 = vadd.f32 0.0, %v1138
      %v1140 = vpop.f32.mrf.mxu0
      %1141 = vmatprep.mubr.f32.mxu0 0.0
      %1142 = vmatmul.mubr.f32.gmra.mxu0 %v969
      %v1143 = vpop.f32.mrf.mxu0
      %v1144 = vadd.f32 0.0, %v1143
      %v1145 = vpop.f32.mrf.mxu0
      %1146 = vmatprep.mubr.f32.mxu0 0.0
      %1147 = vmatmul.mubr.f32.gmra.mxu0 %v972
      %v1148 = vpop.f32.mrf.mxu0
      %v1149 = vadd.f32 0.0, %v1148
      %v1150 = vpop.f32.mrf.mxu0
      %1151 = vmatprep.mubr.f32.mxu0 0.0
      %1152 = vmatmul.mubr.f32.gmra.mxu0 %v975
      %v1153 = vpop.f32.mrf.mxu0
      %v1154 = vadd.f32 0.0, %v1153
      %v1155 = vpop.f32.mrf.mxu0
      %1156 = vmatprep.mubr.f32.mxu0 0.0
      %1157 = vmatmul.mubr.f32.gmra.mxu0 %v978
      %v1158 = vpop.f32.mrf.mxu0
      %v1159 = vadd.f32 0.0, %v1158
      %v1160 = vpop.f32.mrf.mxu0
      %1161 = vmatprep.mubr.f32.mxu0 0.0
      %1162 = vmatmul.mubr.f32.gmra.mxu0 %v981
      %v1163 = vpop.f32.mrf.mxu0
      %v1164 = vadd.f32 0.0, %v1163
      %v1165 = vpop.f32.mrf.mxu0
      %1166 = vmatprep.mubr.f32.mxu0 0.0
      %1167 = vmatmul.mubr.f32.gmra.mxu0 %v984
      %v1168 = vpop.f32.mrf.mxu0
      %v1169 = vadd.f32 0.0, %v1168
      %v1170 = vpop.f32.mrf.mxu0
      %1171 = vmatprep.mubr.f32.mxu0 0.0
      %1172 = vmatmul.mubr.f32.gmra.mxu0 %v987
      %v1173 = vpop.f32.mrf.mxu0
      %v1174 = vadd.f32 0.0, %v1173
      %v1175 = vpop.f32.mrf.mxu0
      %1176 = vmatprep.mubr.f32.mxu0 0.0
      %1177 = vmatmul.mubr.f32.gmra.mxu0 %v990
      %v1178 = vpop.f32.mrf.mxu0
      %v1179 = vadd.f32 0.0, %v1178
      %v1180 = vpop.f32.mrf.mxu0
      %1181 = vmatprep.mubr.f32.mxu0 0.0
      %1182 = vmatmul.mubr.f32.gmra.mxu0 %v993
      %v1183 = vpop.f32.mrf.mxu0
      %v1184 = vadd.f32 0.0, %v1183
      %v1185 = vpop.f32.mrf.mxu0
      %1186 = vmatprep.mubr.f32.mxu0 0.0
      %1187 = vmatmul.mubr.f32.gmra.mxu0 %v996
      %v1188 = vpop.f32.mrf.mxu0
      %v1189 = vadd.f32 0.0, %v1188
      %v1190 = vpop.f32.mrf.mxu0
      %1191 = vmatprep.mubr.f32.mxu0 0.0
      %1192 = vmatmul.mubr.f32.gmra.mxu0 %v999
      %v1193 = vpop.f32.mrf.mxu0
      %v1194 = vadd.f32 0.0, %v1193
      %v1195 = vpop.f32.mrf.mxu0
      %1196 = vmatprep.mubr.f32.mxu0 0.0
      %1197 = vmatmul.mubr.f32.gmra.mxu0 %v1002
      %v1198 = vpop.f32.mrf.mxu0
      %v1199 = vadd.f32 0.0, %v1198
      %v1200 = vpop.f32.mrf.mxu0
      %1201 = vmatprep.mubr.f32.mxu0 0.0
      %1202 = vmatmul.mubr.f32.gmra.mxu0 %v1005
      %v1203 = vpop.f32.mrf.mxu0
      %v1204 = vadd.f32 0.0, %v1203
      %v1205 = vpop.f32.mrf.mxu0
      %1206 = vmatprep.mubr.f32.mxu0 0.0
      %1207 = vmatmul.mubr.f32.gmra.mxu0 %v1008
      %v1208 = vpop.f32.mrf.mxu0
      %v1209 = vadd.f32 0.0, %v1208
      %v1210 = vpop.f32.mrf.mxu0
      %1211 = vmatprep.mubr.f32.mxu0 0.0
      %1212 = vmatmul.mubr.f32.gmra.mxu0 %v1011
      %v1213 = vpop.f32.mrf.mxu0
      %v1214 = vadd.f32 0.0, %v1213
      %v1215 = vpop.f32.mrf.mxu0
      %1216 = vmatprep.mubr.f32.mxu0 0.0
      %1217 = vmatmul.mubr.f32.gmra.mxu0 %v1014
      %v1218 = vpop.f32.mrf.mxu0
      %v1219 = vadd.f32 0.0, %v1218
      %v1220 = vpop.f32.mrf.mxu0
      %1221 = vmatprep.mubr.f32.mxu0 0.0
      %1222 = vmatmul.mubr.f32.gmra.mxu0 %v1017
      %v1223 = vpop.f32.mrf.mxu0
      %v1224 = vadd.f32 0.0, %v1223
      %v1225 = vpop.f32.mrf.mxu0
      %1226 = vmatprep.mubr.f32.mxu0 0.0
      %1227 = vmatmul.mubr.f32.gmra.mxu0 %v1020
      %v1228 = vpop.f32.mrf.mxu0
      %v1229 = vadd.f32 0.0, %v1228
      %v1230 = vpop.f32.mrf.mxu0
      %1231 = vmatprep.mubr.f32.mxu0 0.0
      %1232 = vmatmul.mubr.f32.gmra.mxu0 %v1023
      %v1233 = vpop.f32.mrf.mxu0
      %v1234 = vadd.f32 0.0, %v1233
      %v1235 = vpop.f32.mrf.mxu0
      %1236 = vmatprep.mubr.f32.mxu0 0.0
      %1237 = vmatmul.mubr.f32.gmra.mxu0 %v1026
      %v1238 = vpop.f32.mrf.mxu0
      %v1239 = vadd.f32 0.0, %v1238
      %v1240 = vpop.f32.mrf.mxu0
      %1241 = vmatprep.mubr.f32.mxu0 0.0
      %1242 = vmatmul.mubr.f32.gmra.mxu0 %v1029
      %v1243 = vpop.f32.mrf.mxu0
      %v1244 = vadd.f32 0.0, %v1243
      %v1245 = vpop.f32.mrf.mxu0
      %1246 = vmatprep.mubr.f32.mxu0 0.0
      %1247 = vmatmul.mubr.f32.gmra.mxu0 %v1032
      %v1248 = vpop.f32.mrf.mxu0
      %v1249 = vadd.f32 0.0, %v1248
      %v1250 = vpop.f32.mrf.mxu0
      %1251 = vmatprep.mubr.f32.mxu0 0.0
      %1252 = vmatmul.mubr.f32.gmra.mxu0 %v1035
      %v1253 = vpop.f32.mrf.mxu0
      %v1254 = vadd.f32 0.0, %v1253
      %v1255 = vpop.f32.mrf.mxu0
      %1256 = vmatprep.mubr.f32.mxu0 0.0
      %1257 = vmatmul.mubr.f32.gmra.mxu0 %v1038
      %v1258 = vpop.f32.mrf.mxu0
      %v1259 = vadd.f32 0.0, %v1258
      %v1260 = vpop.f32.mrf.mxu0
      %1261 = vmatprep.mubr.f32.mxu0 0.0
      %1262 = vmatmul.mubr.f32.gmra.mxu0 %v1041
      %v1263 = vpop.f32.mrf.mxu0
      %v1264 = vadd.f32 0.0, %v1263
      %v1265 = vpop.f32.mrf.mxu0
      %1266 = vmatprep.mubr.f32.mxu0 0.0
      %1267 = vmatmul.mubr.f32.gmra.mxu0 %v1044
      %v1268 = vpop.f32.mrf.mxu0
      %v1269 = vadd.f32 0.0, %v1268
      %v1270 = vpop.f32.mrf.mxu0
      %1271 = vmatprep.mubr.f32.mxu0 0.0
      %1272 = vmatmul.mubr.f32.gmra.mxu0 %v1047
      %v1273 = vpop.f32.mrf.mxu0
      %v1274 = vadd.f32 0.0, %v1273
      %v1275 = vpop.f32.mrf.mxu0
      %1276 = vdwg.mxu0
      %v1277 = vadd.f32 %v758, %v1119
      %v1278 = vadd.f32 %v763, %v1124
      %v1279 = vadd.f32 %v768, %v1129
      %v1280 = vadd.f32 %v773, %v1134
      %v1281 = vadd.f32 %v778, %v1139
      %v1282 = vadd.f32 %v783, %v1144
      %v1283 = vadd.f32 %v788, %v1149
      %v1284 = vadd.f32 %v793, %v1154
      %v1285 = vadd.f32 %v798, %v1159
      %v1286 = vadd.f32 %v803, %v1164
      %v1287 = vadd.f32 %v808, %v1169
      %v1288 = vadd.f32 %v813, %v1174
      %v1289 = vadd.f32 %v818, %v1179
      %v1290 = vadd.f32 %v823, %v1184
      %v1291 = vadd.f32 %v828, %v1189
      %v1292 = vadd.f32 %v833, %v1194
      %v1293 = vadd.f32 %v838, %v1199
      %v1294 = vadd.f32 %v843, %v1204
      %v1295 = vadd.f32 %v848, %v1209
      %v1296 = vadd.f32 %v853, %v1214
      %v1297 = vadd.f32 %v858, %v1219
      %v1298 = vadd.f32 %v863, %v1224
      %v1299 = vadd.f32 %v868, %v1229
      %v1300 = vadd.f32 %v873, %v1234
      %v1301 = vadd.f32 %v878, %v1239
      %v1302 = vadd.f32 %v883, %v1244
      %v1303 = vadd.f32 %v888, %v1249
      %v1304 = vadd.f32 %v893, %v1254
      %v1305 = vadd.f32 %v898, %v1259
      %v1306 = vadd.f32 %v903, %v1264
      %v1307 = vadd.f32 %v908, %v1269
      %v1308 = vadd.f32 %v913, %v1274
      %v1309 = vld [vmem:[%s918 + $0x1] sm:$0xff]
      %v1310 = vld [vmem:[%s918 + $0x9] sm:$0xff]
      %v1311 = vld [vmem:[%s918 + $0x19] sm:$0xff]
      %v1312 = vld [vmem:[%s918 + $0x21] sm:$0xff]
      %v1313 = vld [vmem:[%s918 + $0x31] sm:$0xff]
      %v1314 = vld [vmem:[%s918 + $0x39] sm:$0xff]
      %v1315 = vld [vmem:[%s918 + $0x49] sm:$0xff]
      %v1316 = vld [vmem:[%s918 + $0x51] sm:$0xff]
      %v1317 = vld [vmem:[%s918 + $0x61] sm:$0xff]
      %v1318 = vld [vmem:[%s918 + $0x69] sm:$0xff]
      %v1319 = vld [vmem:[%s918 + $0x79] sm:$0xff]
      %v1320 = vld [vmem:[%s918 + $0x81] sm:$0xff]
      %v1321 = vld [vmem:[%s918 + $0x91] sm:$0xff]
      %v1322 = vld [vmem:[%s918 + $0x99] sm:$0xff]
      %v1323 = vld [vmem:[%s918 + $0xa9] sm:$0xff]
      %v1324 = vld [vmem:[%s918 + $0xb1] sm:$0xff]
      %v1325 = vld [vmem:[%s918 + $0xc1] sm:$0xff]
      %v1326 = vld [vmem:[%s918 + $0xc9] sm:$0xff]
      %v1327 = vld [vmem:[%s918 + $0xd9] sm:$0xff]
      %v1328 = vld [vmem:[%s918 + $0xe1] sm:$0xff]
      %v1329 = vld [vmem:[%s918 + $0xf1] sm:$0xff]
      %v1330 = vld [vmem:[%s918 + $0xf9] sm:$0xff]
      %v1331 = vld [vmem:[%s918 + $0x109] sm:$0xff]
      %v1332 = vld [vmem:[%s918 + $0x111] sm:$0xff]
      %v1333 = vld [vmem:[%s918 + $0x121] sm:$0xff]
      %v1334 = vld [vmem:[%s918 + $0x129] sm:$0xff]
      %v1335 = vld [vmem:[%s918 + $0x139] sm:$0xff]
      %v1336 = vld [vmem:[%s918 + $0x141] sm:$0xff]
      %v1337 = vld [vmem:[%s918 + $0x151] sm:$0xff]
      %v1338 = vld [vmem:[%s918 + $0x159] sm:$0xff]
      %v1339 = vld [vmem:[%s918 + $0x169] sm:$0xff]
      %v1340 = vld [vmem:[%s918 + $0x171] sm:$0xff]
      %s1341 = scalar_lea.vmem %s1, 12
      %v1342 = vld [vmem:[%s1341] sm:$0xf]
      %v1344 = vsel %vm266, %v1309, 0
      %v1347 = vsel %vm266, %v1310, 0
      %v1350 = vsel %vm266, %v1311, 0
      %v1353 = vsel %vm266, %v1312, 0
      %v1356 = vsel %vm266, %v1313, 0
      %v1359 = vsel %vm266, %v1314, 0
      %v1362 = vsel %vm266, %v1315, 0
      %v1365 = vsel %vm266, %v1316, 0
      %v1368 = vsel %vm266, %v1317, 0
      %v1371 = vsel %vm266, %v1318, 0
      %v1374 = vsel %vm266, %v1319, 0
      %v1377 = vsel %vm266, %v1320, 0
      %v1380 = vsel %vm266, %v1321, 0
      %v1383 = vsel %vm266, %v1322, 0
      %v1386 = vsel %vm266, %v1323, 0
      %v1389 = vsel %vm266, %v1324, 0
      %v1392 = vsel %vm266, %v1325, 0
      %v1395 = vsel %vm266, %v1326, 0
      %v1398 = vsel %vm266, %v1327, 0
      %v1401 = vsel %vm266, %v1328, 0
      %v1404 = vsel %vm266, %v1329, 0
      %v1407 = vsel %vm266, %v1330, 0
      %v1410 = vsel %vm266, %v1331, 0
      %v1413 = vsel %vm266, %v1332, 0
      %v1416 = vsel %vm266, %v1333, 0
      %v1419 = vsel %vm266, %v1334, 0
      %v1422 = vsel %vm266, %v1335, 0
      %v1425 = vsel %vm266, %v1336, 0
      %v1428 = vsel %vm266, %v1337, 0
      %v1431 = vsel %vm266, %v1338, 0
      %v1434 = vsel %vm266, %v1339, 0
      %v1437 = vsel %vm266, %v1340, 0
      %v1440 = vsel %vm363, %v1342, 0
      %1442 = vmatprep.subr.mxu0 0.0
      %1443 = vmatpush1.msra.mxu0 0.0
      %1444 = vmatprep.subr.mxu0 0.0
      %1445 = vmatpush1.msra.mxu0 0.0
      %1446 = vmatprep.subr.mxu0 0.0
      %1447 = vmatpush1.msra.mxu0 0.0
      %1448 = vmatprep.subr.mxu0 0.0
      %1449 = vmatpush1.msra.mxu0 0.0
      %1450 = vmatprep.subr.mxu0 0.0
      %1451 = vmatpush1.msra.mxu0 0.0
      %1452 = vmatprep.subr.mxu0 0.0
      %1453 = vmatpush1.msra.mxu0 0.0
      %1454 = vmatprep.subr.mxu0 0.0
      %1455 = vmatpush1.msra.mxu0 0.0
      %1456 = vmatprep.subr.mxu0 0.0
      %1457 = vmatpush1.msra.mxu0 0.0
      %1458 = vmatprep.subr.mxu0 0.0
      %1459 = vmatpush1.msra.mxu0 0.0
      %1460 = vmatprep.subr.mxu0 0.0
      %1461 = vmatpush1.msra.mxu0 0.0
      %1462 = vmatprep.subr.mxu0 0.0
      %1463 = vmatpush1.msra.mxu0 0.0
      %1464 = vmatprep.subr.mxu0 0.0
      %1465 = vmatpush1.msra.mxu0 0.0
      %1466 = vmatprep.subr.mxu0 0.0
      %1467 = vmatpush1.msra.mxu0 0.0
      %1468 = vmatprep.subr.mxu0 0.0
      %1469 = vmatpush1.msra.mxu0 0.0
      %1470 = vmatprep.subr.mxu0 0.0
      %1471 = vmatpush1.msra.mxu0 0.0
      %1472 = vmatprep.subr.mxu0 0.0
      %1473 = vmatpush1.msra.mxu0 %v1440
      %1474 = vmatprep.subr.mxu0 0.0
      %1475 = vmatpush2.msra.mxu0 0.0
      %1476 = vmatprep.subr.mxu0 0.0
      %1477 = vmatpush2.msra.mxu0 0.0
      %1478 = vmatprep.subr.mxu0 0.0
      %1479 = vmatpush2.msra.mxu0 0.0
      %1480 = vmatprep.subr.mxu0 0.0
      %1481 = vmatpush2.msra.mxu0 0.0
      %1482 = vmatprep.subr.mxu0 0.0
      %1483 = vmatpush2.msra.mxu0 0.0
      %1484 = vmatprep.subr.mxu0 0.0
      %1485 = vmatpush2.msra.mxu0 0.0
      %1486 = vmatprep.subr.mxu0 0.0
      %1487 = vmatpush2.msra.mxu0 0.0
      %1488 = vmatprep.subr.mxu0 0.0
      %1489 = vmatpush2.msra.mxu0 0.0
      %1490 = vmatprep.subr.mxu0 0.0
      %1491 = vmatpush2.msra.mxu0 0.0
      %1492 = vmatprep.subr.mxu0 0.0
      %1493 = vmatpush2.msra.mxu0 0.0
      %1494 = vmatprep.subr.mxu0 0.0
      %1495 = vmatpush2.msra.mxu0 0.0
      %1496 = vmatprep.subr.mxu0 0.0
      %1497 = vmatpush2.msra.mxu0 0.0
      %1498 = vmatprep.subr.mxu0 0.0
      %1499 = vmatpush2.msra.mxu0 0.0
      %1500 = vmatprep.subr.mxu0 0.0
      %1501 = vmatpush2.msra.mxu0 0.0
      %1502 = vmatprep.subr.mxu0 0.0
      %1503 = vmatpush2.msra.mxu0 0.0
      %1504 = vmatprep.subr.mxu0 0.0
      %1505 = vmatpush2.msra.mxu0 0.0
      %1506 = vmatprep.mubr.f32.mxu0 0.0
      %1507 = vmatmul.mubr.f32.gmra.mxu0 %v1344
      %v1508 = vpop.f32.mrf.mxu0
      %v1509 = vadd.f32 0.0, %v1508
      %v1510 = vpop.f32.mrf.mxu0
      %1511 = vmatprep.mubr.f32.mxu0 0.0
      %1512 = vmatmul.mubr.f32.gmra.mxu0 %v1347
      %v1513 = vpop.f32.mrf.mxu0
      %v1514 = vadd.f32 0.0, %v1513
      %v1515 = vpop.f32.mrf.mxu0
      %1516 = vmatprep.mubr.f32.mxu0 0.0
      %1517 = vmatmul.mubr.f32.gmra.mxu0 %v1350
      %v1518 = vpop.f32.mrf.mxu0
      %v1519 = vadd.f32 0.0, %v1518
      %v1520 = vpop.f32.mrf.mxu0
      %1521 = vmatprep.mubr.f32.mxu0 0.0
      %1522 = vmatmul.mubr.f32.gmra.mxu0 %v1353
      %v1523 = vpop.f32.mrf.mxu0
      %v1524 = vadd.f32 0.0, %v1523
      %v1525 = vpop.f32.mrf.mxu0
      %1526 = vmatprep.mubr.f32.mxu0 0.0
      %1527 = vmatmul.mubr.f32.gmra.mxu0 %v1356
      %v1528 = vpop.f32.mrf.mxu0
      %v1529 = vadd.f32 0.0, %v1528
      %v1530 = vpop.f32.mrf.mxu0
      %1531 = vmatprep.mubr.f32.mxu0 0.0
      %1532 = vmatmul.mubr.f32.gmra.mxu0 %v1359
      %v1533 = vpop.f32.mrf.mxu0
      %v1534 = vadd.f32 0.0, %v1533
      %v1535 = vpop.f32.mrf.mxu0
      %1536 = vmatprep.mubr.f32.mxu0 0.0
      %1537 = vmatmul.mubr.f32.gmra.mxu0 %v1362
      %v1538 = vpop.f32.mrf.mxu0
      %v1539 = vadd.f32 0.0, %v1538
      %v1540 = vpop.f32.mrf.mxu0
      %1541 = vmatprep.mubr.f32.mxu0 0.0
      %1542 = vmatmul.mubr.f32.gmra.mxu0 %v1365
      %v1543 = vpop.f32.mrf.mxu0
      %v1544 = vadd.f32 0.0, %v1543
      %v1545 = vpop.f32.mrf.mxu0
      %1546 = vmatprep.mubr.f32.mxu0 0.0
      %1547 = vmatmul.mubr.f32.gmra.mxu0 %v1368
      %v1548 = vpop.f32.mrf.mxu0
      %v1549 = vadd.f32 0.0, %v1548
      %v1550 = vpop.f32.mrf.mxu0
      %1551 = vmatprep.mubr.f32.mxu0 0.0
      %1552 = vmatmul.mubr.f32.gmra.mxu0 %v1371
      %v1553 = vpop.f32.mrf.mxu0
      %v1554 = vadd.f32 0.0, %v1553
      %v1555 = vpop.f32.mrf.mxu0
      %1556 = vmatprep.mubr.f32.mxu0 0.0
      %1557 = vmatmul.mubr.f32.gmra.mxu0 %v1374
      %v1558 = vpop.f32.mrf.mxu0
      %v1559 = vadd.f32 0.0, %v1558
      %v1560 = vpop.f32.mrf.mxu0
      %1561 = vmatprep.mubr.f32.mxu0 0.0
      %1562 = vmatmul.mubr.f32.gmra.mxu0 %v1377
      %v1563 = vpop.f32.mrf.mxu0
      %v1564 = vadd.f32 0.0, %v1563
      %v1565 = vpop.f32.mrf.mxu0
      %1566 = vmatprep.mubr.f32.mxu0 0.0
      %1567 = vmatmul.mubr.f32.gmra.mxu0 %v1380
      %v1568 = vpop.f32.mrf.mxu0
      %v1569 = vadd.f32 0.0, %v1568
      %v1570 = vpop.f32.mrf.mxu0
      %1571 = vmatprep.mubr.f32.mxu0 0.0
      %1572 = vmatmul.mubr.f32.gmra.mxu0 %v1383
      %v1573 = vpop.f32.mrf.mxu0
      %v1574 = vadd.f32 0.0, %v1573
      %v1575 = vpop.f32.mrf.mxu0
      %1576 = vmatprep.mubr.f32.mxu0 0.0
      %1577 = vmatmul.mubr.f32.gmra.mxu0 %v1386
      %v1578 = vpop.f32.mrf.mxu0
      %v1579 = vadd.f32 0.0, %v1578
      %v1580 = vpop.f32.mrf.mxu0
      %1581 = vmatprep.mubr.f32.mxu0 0.0
      %1582 = vmatmul.mubr.f32.gmra.mxu0 %v1389
      %v1583 = vpop.f32.mrf.mxu0
      %v1584 = vadd.f32 0.0, %v1583
      %v1585 = vpop.f32.mrf.mxu0
      %1586 = vmatprep.mubr.f32.mxu0 0.0
      %1587 = vmatmul.mubr.f32.gmra.mxu0 %v1392
      %v1588 = vpop.f32.mrf.mxu0
      %v1589 = vadd.f32 0.0, %v1588
      %v1590 = vpop.f32.mrf.mxu0
      %1591 = vmatprep.mubr.f32.mxu0 0.0
      %1592 = vmatmul.mubr.f32.gmra.mxu0 %v1395
      %v1593 = vpop.f32.mrf.mxu0
      %v1594 = vadd.f32 0.0, %v1593
      %v1595 = vpop.f32.mrf.mxu0
      %1596 = vmatprep.mubr.f32.mxu0 0.0
      %1597 = vmatmul.mubr.f32.gmra.mxu0 %v1398
      %v1598 = vpop.f32.mrf.mxu0
      %v1599 = vadd.f32 0.0, %v1598
      %v1600 = vpop.f32.mrf.mxu0
      %1601 = vmatprep.mubr.f32.mxu0 0.0
      %1602 = vmatmul.mubr.f32.gmra.mxu0 %v1401
      %v1603 = vpop.f32.mrf.mxu0
      %v1604 = vadd.f32 0.0, %v1603
      %v1605 = vpop.f32.mrf.mxu0
      %1606 = vmatprep.mubr.f32.mxu0 0.0
      %1607 = vmatmul.mubr.f32.gmra.mxu0 %v1404
      %v1608 = vpop.f32.mrf.mxu0
      %v1609 = vadd.f32 0.0, %v1608
      %v1610 = vpop.f32.mrf.mxu0
      %1611 = vmatprep.mubr.f32.mxu0 0.0
      %1612 = vmatmul.mubr.f32.gmra.mxu0 %v1407
      %v1613 = vpop.f32.mrf.mxu0
      %v1614 = vadd.f32 0.0, %v1613
      %v1615 = vpop.f32.mrf.mxu0
      %1616 = vmatprep.mubr.f32.mxu0 0.0
      %1617 = vmatmul.mubr.f32.gmra.mxu0 %v1410
      %v1618 = vpop.f32.mrf.mxu0
      %v1619 = vadd.f32 0.0, %v1618
      %v1620 = vpop.f32.mrf.mxu0
      %1621 = vmatprep.mubr.f32.mxu0 0.0
      %1622 = vmatmul.mubr.f32.gmra.mxu0 %v1413
      %v1623 = vpop.f32.mrf.mxu0
      %v1624 = vadd.f32 0.0, %v1623
      %v1625 = vpop.f32.mrf.mxu0
      %1626 = vmatprep.mubr.f32.mxu0 0.0
      %1627 = vmatmul.mubr.f32.gmra.mxu0 %v1416
      %v1628 = vpop.f32.mrf.mxu0
      %v1629 = vadd.f32 0.0, %v1628
      %v1630 = vpop.f32.mrf.mxu0
      %1631 = vmatprep.mubr.f32.mxu0 0.0
      %1632 = vmatmul.mubr.f32.gmra.mxu0 %v1419
      %v1633 = vpop.f32.mrf.mxu0
      %v1634 = vadd.f32 0.0, %v1633
      %v1635 = vpop.f32.mrf.mxu0
      %1636 = vmatprep.mubr.f32.mxu0 0.0
      %1637 = vmatmul.mubr.f32.gmra.mxu0 %v1422
      %v1638 = vpop.f32.mrf.mxu0
      %v1639 = vadd.f32 0.0, %v1638
      %v1640 = vpop.f32.mrf.mxu0
      %1641 = vmatprep.mubr.f32.mxu0 0.0
      %1642 = vmatmul.mubr.f32.gmra.mxu0 %v1425
      %v1643 = vpop.f32.mrf.mxu0
      %v1644 = vadd.f32 0.0, %v1643
      %v1645 = vpop.f32.mrf.mxu0
      %1646 = vmatprep.mubr.f32.mxu0 0.0
      %1647 = vmatmul.mubr.f32.gmra.mxu0 %v1428
      %v1648 = vpop.f32.mrf.mxu0
      %v1649 = vadd.f32 0.0, %v1648
      %v1650 = vpop.f32.mrf.mxu0
      %1651 = vmatprep.mubr.f32.mxu0 0.0
      %1652 = vmatmul.mubr.f32.gmra.mxu0 %v1431
      %v1653 = vpop.f32.mrf.mxu0
      %v1654 = vadd.f32 0.0, %v1653
      %v1655 = vpop.f32.mrf.mxu0
      %1656 = vmatprep.mubr.f32.mxu0 0.0
      %1657 = vmatmul.mubr.f32.gmra.mxu0 %v1434
      %v1658 = vpop.f32.mrf.mxu0
      %v1659 = vadd.f32 0.0, %v1658
      %v1660 = vpop.f32.mrf.mxu0
      %1661 = vmatprep.mubr.f32.mxu0 0.0
      %1662 = vmatmul.mubr.f32.gmra.mxu0 %v1437
      %v1663 = vpop.f32.mrf.mxu0
      %v1664 = vadd.f32 0.0, %v1663
      %v1665 = vpop.f32.mrf.mxu0
      %1666 = vdwg.mxu0
      %v1667 = vadd.f32 %v1277, %v1509
      %v1668 = vadd.f32 %v1278, %v1514
      %v1669 = vadd.f32 %v1279, %v1519
      %v1670 = vadd.f32 %v1280, %v1524
      %v1671 = vadd.f32 %v1281, %v1529
      %v1672 = vadd.f32 %v1282, %v1534
      %v1673 = vadd.f32 %v1283, %v1539
      %v1674 = vadd.f32 %v1284, %v1544
      %v1675 = vadd.f32 %v1285, %v1549
      %v1676 = vadd.f32 %v1286, %v1554
      %v1677 = vadd.f32 %v1287, %v1559
      %v1678 = vadd.f32 %v1288, %v1564
      %v1679 = vadd.f32 %v1289, %v1569
      %v1680 = vadd.f32 %v1290, %v1574
      %v1681 = vadd.f32 %v1291, %v1579
      %v1682 = vadd.f32 %v1292, %v1584
      %v1683 = vadd.f32 %v1293, %v1589
      %v1684 = vadd.f32 %v1294, %v1594
      %v1685 = vadd.f32 %v1295, %v1599
      %v1686 = vadd.f32 %v1296, %v1604
      %v1687 = vadd.f32 %v1297, %v1609
      %v1688 = vadd.f32 %v1298, %v1614
      %v1689 = vadd.f32 %v1299, %v1619
      %v1690 = vadd.f32 %v1300, %v1624
      %v1691 = vadd.f32 %v1301, %v1629
      %v1692 = vadd.f32 %v1302, %v1634
      %v1693 = vadd.f32 %v1303, %v1639
      %v1694 = vadd.f32 %v1304, %v1644
      %v1695 = vadd.f32 %v1305, %v1649
      %v1696 = vadd.f32 %v1306, %v1654
      %v1697 = vadd.f32 %v1307, %v1659
      %v1698 = vadd.f32 %v1308, %v1664
      %v1699 = vld [vmem:[%s2] sm:$0x1]
      %v1701 = vlaneseq
      %v1702 = vshrl.u32 %v1701, 7
      %v1703 = vsub.s32 0, %v1702
      %v1704 = vrot.slane %v1699, %v1703
      %v1706 = vadd.f32 %v1667, %v1704
      %v1707 = vadd.f32 %v1668, %v1704
      %v1708 = vadd.f32 %v1669, %v1704
      %v1709 = vadd.f32 %v1670, %v1704
      %v1710 = vadd.f32 %v1671, %v1704
      %v1711 = vadd.f32 %v1672, %v1704
      %v1712 = vadd.f32 %v1673, %v1704
      %v1713 = vadd.f32 %v1674, %v1704
      %v1714 = vadd.f32 %v1675, %v1704
      %v1715 = vadd.f32 %v1676, %v1704
      %v1716 = vadd.f32 %v1677, %v1704
      %v1717 = vadd.f32 %v1678, %v1704
      %v1718 = vadd.f32 %v1679, %v1704
      %v1719 = vadd.f32 %v1680, %v1704
      %v1720 = vadd.f32 %v1681, %v1704
      %v1721 = vadd.f32 %v1682, %v1704
      %v1722 = vadd.f32 %v1683, %v1704
      %v1723 = vadd.f32 %v1684, %v1704
      %v1724 = vadd.f32 %v1685, %v1704
      %v1725 = vadd.f32 %v1686, %v1704
      %v1726 = vadd.f32 %v1687, %v1704
      %v1727 = vadd.f32 %v1688, %v1704
      %v1728 = vadd.f32 %v1689, %v1704
      %v1729 = vadd.f32 %v1690, %v1704
      %v1730 = vadd.f32 %v1691, %v1704
      %v1731 = vadd.f32 %v1692, %v1704
      %v1732 = vadd.f32 %v1693, %v1704
      %v1733 = vadd.f32 %v1694, %v1704
      %v1734 = vadd.f32 %v1695, %v1704
      %v1735 = vadd.f32 %v1696, %v1704
      %v1736 = vadd.f32 %v1697, %v1704
      %v1737 = vadd.f32 %v1698, %v1704
      %vm1738 = vcmask 261120
      %1739 = vst.msk [vmem:[%s194] sm:$0xff] %vm1738, %v1706
      %1740 = vst.msk [vmem:[%s194 + $0x8] sm:$0xff] %vm1738, %v1707
      %1741 = vst.msk [vmem:[%s194 + $0x10] sm:$0xff] %vm1738, %v1708
      %1742 = vst.msk [vmem:[%s194 + $0x18] sm:$0xff] %vm1738, %v1709
      %1743 = vst.msk [vmem:[%s194 + $0x20] sm:$0xff] %vm1738, %v1710
      %1744 = vst.msk [vmem:[%s194 + $0x28] sm:$0xff] %vm1738, %v1711
      %1745 = vst.msk [vmem:[%s194 + $0x30] sm:$0xff] %vm1738, %v1712
      %1746 = vst.msk [vmem:[%s194 + $0x38] sm:$0xff] %vm1738, %v1713
      %1747 = vst.msk [vmem:[%s194 + $0x40] sm:$0xff] %vm1738, %v1714
      %1748 = vst.msk [vmem:[%s194 + $0x48] sm:$0xff] %vm1738, %v1715
      %1749 = vst.msk [vmem:[%s194 + $0x50] sm:$0xff] %vm1738, %v1716
      %1750 = vst.msk [vmem:[%s194 + $0x58] sm:$0xff] %vm1738, %v1717
      %1751 = vst.msk [vmem:[%s194 + $0x60] sm:$0xff] %vm1738, %v1718
      %1752 = vst.msk [vmem:[%s194 + $0x68] sm:$0xff] %vm1738, %v1719
      %1753 = vst.msk [vmem:[%s194 + $0x70] sm:$0xff] %vm1738, %v1720
      %1754 = vst.msk [vmem:[%s194 + $0x78] sm:$0xff] %vm1738, %v1721
      %1755 = vst.msk [vmem:[%s194 + $0x80] sm:$0xff] %vm1738, %v1722
      %1756 = vst.msk [vmem:[%s194 + $0x88] sm:$0xff] %vm1738, %v1723
      %1757 = vst.msk [vmem:[%s194 + $0x90] sm:$0xff] %vm1738, %v1724
      %1758 = vst.msk [vmem:[%s194 + $0x98] sm:$0xff] %vm1738, %v1725
      %1759 = vst.msk [vmem:[%s194 + $0xa0] sm:$0xff] %vm1738, %v1726
      %1760 = vst.msk [vmem:[%s194 + $0xa8] sm:$0xff] %vm1738, %v1727
      %1761 = vst.msk [vmem:[%s194 + $0xb0] sm:$0xff] %vm1738, %v1728
      %1762 = vst.msk [vmem:[%s194 + $0xb8] sm:$0xff] %vm1738, %v1729
      %1763 = vst.msk [vmem:[%s194 + $0xc0] sm:$0xff] %vm1738, %v1730
      %1764 = vst.msk [vmem:[%s194 + $0xc8] sm:$0xff] %vm1738, %v1731
      %1765 = vst.msk [vmem:[%s194 + $0xd0] sm:$0xff] %vm1738, %v1732
      %1766 = vst.msk [vmem:[%s194 + $0xd8] sm:$0xff] %vm1738, %v1733
      %1767 = vst.msk [vmem:[%s194 + $0xe0] sm:$0xff] %vm1738, %v1734
      %1768 = vst.msk [vmem:[%s194 + $0xe8] sm:$0xff] %vm1738, %v1735
      %1769 = vst.msk [vmem:[%s194 + $0xf0] sm:$0xff] %vm1738, %v1736
      %1770 = vst.msk [vmem:[%s194 + $0xf8] sm:$0xff] %vm1738, %v1737
      %s1771 = smul.u32 16, %s19
      %p1772 = scmp.lt.s32.totalorder %s18, 1
      %s1773 = scalar_select %p1772, %s18, 1
      %p1774 = scmp.lt.s32.totalorder %s1771, 15
      %s1775 = scalar_select %p1774, %s1771, 15
      %s1776 = smul.addr %s1775, 2
      %s1777 = smul.addr %s1773, 32
      %s1778 = sadd.s32 %s1776, %s1777
      %s1779 = smul.addr %s1778, 8
      %s1780 = scalar_lea.vmem %s3, %s1779
      // Predicated region
      $region33: #{meta_conv_transpose2d.1} parent=31 // pred_check
        %p1781 = pneg %p114
      $region34: #{meta_conv_transpose2d.1} parent=31 // pred_check_branch
        %1783 = sbr.rel (%p1781) target = $region36
      $region35: #{meta_conv_transpose2d.1} parent=31 // pred_region
        %s1784 = smul.u32 16, %s19
      $region36: #{meta_conv_transpose2d.1} parent=31 // pred_fallthru
        _
    $region32: #{meta_conv_transpose2d.1} parent=5 // pred_fallthru
      _
    %p1785 = scmp.le.s32.totalorder 2, %s9
    // Predicated region
    $region37: #{meta_conv_transpose2d.1} parent=5 // pred_check
      %p1786 = pneg %p1785
    $region38: #{meta_conv_transpose2d.1} parent=5 // pred_check_branch
      %1788 = sbr.rel (%p1786) target = $region40
    $region39: #{meta_conv_transpose2d.1} parent=5 // pred_region
      %s1789 = ssub.s32 %s9, 2
      // Predicated region
      $region41: #{meta_conv_transpose2d.1} parent=39 // pred_check
        %p1790 = pneg %p120
      $region42: #{meta_conv_transpose2d.1} parent=39 // pred_check_branch
        %1792 = sbr.rel (%p1790) target = $region44
      $region43: #{meta_conv_transpose2d.1} parent=39 // pred_region
        %s1793 = smul.u32 16, %s21
        %p1794 = scmp.lt.s32.totalorder %s20, 1
        %s1795 = scalar_select %p1794, %s20, 1
        %p1796 = scmp.lt.s32.totalorder %s1793, 15
        %s1797 = scalar_select %p1796, %s1793, 15
        %s1798 = smul.addr %s1797, 2
        %s1799 = smul.addr %s1795, 32
        %s1800 = sadd.s32 %s1798, %s1799
        %s1801 = smul.addr %s1800, 8
        %s1802 = scalar_lea.vmem %s3, %s1801
      $region44: #{meta_conv_transpose2d.1} parent=39 // pred_fallthru
        _
    $region40: #{meta_conv_transpose2d.1} parent=5 // pred_fallthru
      _
  $region6: #{meta_conv_transpose2d.1} parent=0 // loop_footer
    %s13 = sadd.s32 1, %s9
  $region7: #{meta_conv_transpose2d.1} parent=0 // loop_footer_branch
    %8 = sbr.rel target = $region3
  $region8: #{meta_conv_transpose2d.1} parent=0 // loop_exit
    _

</llo_original>
